<compile_context>
chip_gen: v7x
topology: tpu7x:2x2x1
jax: 0.10.0
libtpu: 0.0.40
codegen_flags: <defaults>
</compile_context>

<pallas_src>
import jax
import jax.numpy as jnp
from jax import lax
from jax.experimental import pallas as pl
from jax.experimental.pallas import tpu as pltpu


# ---------------------------------------------------------------------------
# In-kernel helpers
# ---------------------------------------------------------------------------
def _layernorm(x, gamma, beta, eps=1e-5):
    # x: (N, D); gamma/beta: (1, D).  PyTorch LayerNorm (biased variance).
    mu = jnp.mean(x, axis=-1, keepdims=True)
    var = jnp.mean((x - mu) ** 2, axis=-1, keepdims=True)
    return (x - mu) * lax.rsqrt(var + eps) * gamma + beta


# ---------------------------------------------------------------------------
# Fused kernel: one grid step = (batch block b, layer l)
#   grid axes: (B "parallel", depth "arbitrary")
#   o_ref holds the VMEM-resident activation for batch b across all layers.
# ---------------------------------------------------------------------------
def make_transformer_kernel(heads, dim_head):
    inner = heads * dim_head

    def kernel(x_ref, vec_ref, b1_ref, wqkv_t_ref, wo_t_ref,
               w1_ref, w2_ref, o_ref):
        layer = pl.program_id(1)

        # Layer 0: seed the resident activation from the input.
        @pl.when(layer == 0)
        def _():
            o_ref[...] = x_ref[...]

        x = o_ref[0]                              # (N, D) float32
        n, d = x.shape

        vec = vec_ref[0]                          # (6, D) packed per-layer vectors
        ln1_g, ln1_b, bo = vec[0:1], vec[1:2], vec[2:3]
        ln2_g, ln2_b, b2 = vec[3:4], vec[4:5], vec[5:6]
        b1 = b1_ref[0]                            # (1, mlp_dim)

        # ---------------- PreNorm(Attention) + residual ----------------
        xn = _layernorm(x, ln1_g, ln1_b)                                   # (N, D)

        # One fused QKV projection (softmax scale folded into the Q rows),
        # column-major so the per-head view is a sublane-aligned reshape.
        qkv_t = jnp.dot(wqkv_t_ref[0], xn.T,
                        preferred_element_type=jnp.float32)                # (3*H*dh, N)
        q_t = qkv_t[0 * inner:1 * inner].reshape(heads, dim_head, n)       # (H, dh, N)
        k_t = qkv_t[1 * inner:2 * inner].reshape(heads, dim_head, n)       # (H, dh, N)
        v_t = qkv_t[2 * inner:3 * inner].reshape(heads, dim_head, n)       # (H, dh, N)

        q = jnp.swapaxes(q_t, -1, -2)                                      # (H, N, dh)
        s = jnp.einsum('hnd,hdm->hnm', q, k_t,
                       preferred_element_type=jnp.float32)                 # (H, N, N)
        s = s - jnp.max(s, axis=-1, keepdims=True)
        p = jnp.exp(s)
        attn = p / jnp.sum(p, axis=-1, keepdims=True)                      # exact softmax

        # Context kept column-major: ctx_t[h, k, i] = sum_j v_t[h,k,j] attn[h,i,j]
        ctx_t = jnp.einsum('hkj,hij->hki', v_t, attn,
                           preferred_element_type=jnp.float32)             # (H, dh, N)

        # Fused output projection: ONE contraction over H*dh.
        proj_t = jnp.dot(wo_t_ref[0], ctx_t.reshape(inner, n),
                         preferred_element_type=jnp.float32)               # (D, N)
        x = x + proj_t.T + bo

        # ---------------- PreNorm(FeedForward) + residual ----------------
        xn2 = _layernorm(x, ln2_g, ln2_b)
        h1 = jnp.dot(xn2, w1_ref[0], preferred_element_type=jnp.float32) + b1
        # exact (erf-based) GELU, matching nn.GELU() default
        h1 = 0.5 * h1 * (1.0 + lax.erf(h1 * 0.7071067811865476))
        y = jnp.dot(h1, w2_ref[0], preferred_element_type=jnp.float32) + b2

        o_ref[0] = x + y

    return kernel


# ---------------------------------------------------------------------------
# Host-side parameter construction / restructuring
# ---------------------------------------------------------------------------
def init_params(key, *, dim, depth, heads, dim_head, mlp_dim):
    """Synthetic stacked per-layer weights, (in_features, out_features) layout,
    with PyTorch's [Q | K | V], head-major column ordering in wqkv."""
    inner = heads * dim_head
    ks = jax.random.split(key, 6)
    return {
        "ln1_g": jnp.ones((depth, dim), jnp.float32),
        "ln1_b": jnp.zeros((depth, dim), jnp.float32),
        "wqkv": 0.05 * jax.random.normal(ks[0], (depth, dim, 3 * inner), jnp.float32),
        "wo":   0.05 * jax.random.normal(ks[1], (depth, inner, dim), jnp.float32),
        "bo":   0.01 * jax.random.normal(ks[2], (depth, dim), jnp.float32),
        "ln2_g": jnp.ones((depth, dim), jnp.float32),
        "ln2_b": jnp.zeros((depth, dim), jnp.float32),
        "w1":   0.05 * jax.random.normal(ks[3], (depth, dim, mlp_dim), jnp.float32),
        "b1":   0.01 * jax.random.normal(ks[4], (depth, mlp_dim), jnp.float32),
        "w2":   0.05 * jax.random.normal(ks[5], (depth, mlp_dim, dim), jnp.float32),
        "b2":   jnp.zeros((depth, dim), jnp.float32),
    }


def prepare_params(p, *, heads, dim_head):
    """One-time host-side (XLA) prep:
      * fold the attention scale into the Q columns of Wqkv,
      * transpose Wqkv / Wo for the column-major in-kernel projections,
      * pack the six D-sized per-layer vectors into one (depth, 6, D) slab."""
    inner = heads * dim_head
    col_scale = jnp.concatenate([
        jnp.full((inner,), dim_head ** -0.5, jnp.float32),
        jnp.ones((2 * inner,), jnp.float32)])
    wqkv_t = jnp.transpose(p["wqkv"] * col_scale[None, None, :], (0, 2, 1))  # (depth, 3*inner, D)
    wo_t = jnp.transpose(p["wo"], (0, 2, 1))                                  # (depth, D, inner)
    vecs = jnp.stack([p["ln1_g"], p["ln1_b"], p["bo"],
                      p["ln2_g"], p["ln2_b"], p["b2"]], axis=1)               # (depth, 6, D)
    return {
        "vecs": vecs,
        "b1": p["b1"][:, None, :],     # (depth, 1, mlp_dim)
        "wqkv_t": wqkv_t,
        "wo_t": wo_t,
        "w1": p["w1"],
        "w2": p["w2"],
    }


# ---------------------------------------------------------------------------
# Single fused pallas_call over grid (B, depth)
# ---------------------------------------------------------------------------
def transformer_forward(x, params, *, heads, dim_head):
    B, N, D = x.shape
    pp = prepare_params(params, heads=heads, dim_head=dim_head)
    depth = pp["wqkv_t"].shape[0]
    inner = heads * dim_head
    mlp = pp["w1"].shape[-1]

    def lsel(ndim):
        zeros = (0,) * (ndim - 1)
        return lambda b, l: (l,) + zeros          # select per-layer weight slab

    in_specs = [
        pl.BlockSpec((1, N, D), lambda b, l: (b, 0, 0)),      # x (layer-0 seed)
        pl.BlockSpec((1, 6, D), lsel(3)),                     # packed per-layer vectors
        pl.BlockSpec((1, 1, mlp), lsel(3)),                   # b1
        pl.BlockSpec((1, 3 * inner, D), lsel(3)),             # Wqkv^T (scale folded)
        pl.BlockSpec((1, D, inner), lsel(3)),                 # Wo^T
        pl.BlockSpec((1, D, mlp), lsel(3)),                   # W1
        pl.BlockSpec((1, mlp, D), lsel(3)),                   # W2
    ]

    kernel = make_transformer_kernel(heads, dim_head)

    return pl.pallas_call(
        kernel,
        out_shape=jax.ShapeDtypeStruct((B, N, D), x.dtype),
        grid_spec=pl.GridSpec(
            grid=(B, depth),                       # depth MUST stay innermost
            in_specs=in_specs,
            out_specs=pl.BlockSpec((1, N, D), lambda b, l: (b, 0, 0)),
        ),
        compiler_params=pltpu.CompilerParams(
            dimension_semantics=("parallel", "arbitrary"),
            vmem_limit_bytes=32 * 1024 * 1024),
    )(x, pp["vecs"], pp["b1"], pp["wqkv_t"], pp["wo_t"], pp["w1"], pp["w2"])


# ---------------------------------------------------------------------------
# Pure-JAX reference (matches the PyTorch module semantics, eval mode)
# ---------------------------------------------------------------------------
def transformer_ref(x, p, *, heads, dim_head):
    depth = p["wqkv"].shape[0]
    scale = dim_head ** -0.5

    def ln(t, g, b, eps=1e-5):
        mu = t.mean(-1, keepdims=True)
        var = ((t - mu) ** 2).mean(-1, keepdims=True)
        return (t - mu) / jnp.sqrt(var + eps) * g + b

    B, N, _ = x.shape
    for l in range(depth):
        xn = ln(x, p["ln1_g"][l], p["ln1_b"][l])
        qkv = xn @ p["wqkv"][l]
        q, k, v = jnp.split(qkv, 3, axis=-1)
        sh = lambda t: t.reshape(B, N, heads, dim_head).transpose(0, 2, 1, 3)
        q, k, v = sh(q), sh(k), sh(v)
        s = jnp.einsum('bhnd,bhmd->bhnm', q, k) * scale
        a = jax.nn.softmax(s, axis=-1)
        ctx = jnp.einsum('bhnm,bhmd->bhnd', a, v)
        ctx = ctx.transpose(0, 2, 1, 3).reshape(B, N, heads * dim_head)
        x = x + ctx @ p["wo"][l] + p["bo"][l]
        xn2 = ln(x, p["ln2_g"][l], p["ln2_b"][l])
        h = xn2 @ p["w1"][l] + p["b1"][l]
        h = 0.5 * h * (1.0 + lax.erf(h * 0.7071067811865476))
        x = x + h @ p["w2"][l] + p["b2"][l]
    return x


# ---------------------------------------------------------------------------
if __name__ == "__main__":
    # Small config consistent with the module: dim=32, depth=2, heads=4,
    # dim_head=8, mlp_dim=64; input x: (batch=2, tokens=8, dim=32).
    B, N, DIM, DEPTH, HEADS, DIM_HEAD, MLP_DIM = 2, 8, 32, 2, 4, 8, 64

    key = jax.random.PRNGKey(0)
    key_x, key_p = jax.random.split(key)
    x = jax.random.normal(key_x, (B, N, DIM), jnp.float32)
    params = init_params(key_p, dim=DIM, depth=DEPTH, heads=HEADS,
                         dim_head=DIM_HEAD, mlp_dim=MLP_DIM)

    out = transformer_forward(x, params, heads=HEADS, dim_head=DIM_HEAD)
    out = jax.block_until_ready(out)
    assert out.shape == (B, N, DIM) and out.dtype == jnp.float32

    ref = jax.block_until_ready(transformer_ref(x, params, heads=HEADS,
                                                dim_head=DIM_HEAD))
    assert jnp.allclose(out, ref, atol=1e-3, rtol=1e-3), \
        f"max abs err {jnp.max(jnp.abs(out - ref))}"

    print("KERNEL_OK")
</pallas_src>

<mosaic_0001>
module attributes {stable_mosaic.version = 11 : i64} {
  func.func @kernel(%arg0: i32, %arg1: i32, %arg2: memref<1x8x32xf32, #tpu.memory_space<vmem>>, %arg3: memref<1x6x32xf32, #tpu.memory_space<vmem>>, %arg4: memref<1x1x64xf32, #tpu.memory_space<vmem>>, %arg5: memref<1x96x32xf32, #tpu.memory_space<vmem>>, %arg6: memref<1x32x32xf32, #tpu.memory_space<vmem>>, %arg7: memref<1x32x64xf32, #tpu.memory_space<vmem>>, %arg8: memref<1x64x32xf32, #tpu.memory_space<vmem>>, %arg9: memref<1x8x32xf32, #tpu.memory_space<vmem>>) attributes {dimension_semantics = [#tpu.dimension_semantics<parallel>, #tpu.dimension_semantics<arbitrary>], iteration_bounds = array<i64: 2, 2>, scalar_prefetch = 0 : i64, scratch_operands = 0 : i64, tpu.core_type = #tpu.core_type<tc>, window_params = [{transform_indices = @transform_0, window_bounds = array<i64: 1, 8, 32>}, {transform_indices = @transform_1, window_bounds = array<i64: 1, 6, 32>}, {transform_indices = @transform_2, window_bounds = array<i64: 1, 1, 64>}, {transform_indices = @transform_3, window_bounds = array<i64: 1, 96, 32>}, {transform_indices = @transform_4, window_bounds = array<i64: 1, 32, 32>}, {transform_indices = @transform_5, window_bounds = array<i64: 1, 32, 64>}, {transform_indices = @transform_6, window_bounds = array<i64: 1, 64, 32>}, {transform_indices = @transform_7, window_bounds = array<i64: 1, 8, 32>}]} {
    %c0_i32 = arith.constant 0 : i32
    %0 = arith.cmpi eq, %arg1, %c0_i32 : i32
    %1 = arith.extui %0 : i1 to i32
    %c0_i32_0 = arith.constant 0 : i32
    %2 = arith.cmpi ne, %1, %c0_i32_0 : i32
    scf.if %2 {
      %c0_44 = arith.constant 0 : index
      %c0_45 = arith.constant 0 : index
      %c0_46 = arith.constant 0 : index
      %111 = vector.load %arg2[%c0_44, %c0_45, %c0_46] : memref<1x8x32xf32, #tpu.memory_space<vmem>>, vector<1x8x32xf32>
      %c0_47 = arith.constant 0 : index
      %c0_48 = arith.constant 0 : index
      %c0_49 = arith.constant 0 : index
      %112 = vector.load %arg9[%c0_47, %c0_48, %c0_49] : memref<1x8x32xf32, #tpu.memory_space<vmem>>, vector<1x8x32xf32>
      tpu.vector_store %arg9[%c0_47, %c0_48, %c0_49], %111 {strides = array<i32>} : memref<1x8x32xf32, #tpu.memory_space<vmem>>, vector<1x8x32xf32>,
    } else {
    }
    %c0 = arith.constant 0 : index
    %c0_1 = arith.constant 0 : index
    %c0_2 = arith.constant 0 : index
    %3 = vector.load %arg9[%c0, %c0_1, %c0_2] : memref<1x8x32xf32, #tpu.memory_space<vmem>>, vector<1x8x32xf32>
    %4 = vector.shape_cast %3 : vector<1x8x32xf32> to vector<8x32xf32>
    %c0_3 = arith.constant 0 : index
    %c0_4 = arith.constant 0 : index
    %c0_5 = arith.constant 0 : index
    %5 = vector.load %arg3[%c0_3, %c0_4, %c0_5] : memref<1x6x32xf32, #tpu.memory_space<vmem>>, vector<1x6x32xf32>
    %6 = vector.shape_cast %5 : vector<1x6x32xf32> to vector<6x32xf32>
    %7 = vector.extract_strided_slice %6 {offsets = [0, 0], sizes = [1, 32], strides = [1, 1]} : vector<6x32xf32> to vector<1x32xf32>
    %8 = vector.extract_strided_slice %6 {offsets = [1, 0], sizes = [1, 32], strides = [1, 1]} : vector<6x32xf32> to vector<1x32xf32>
    %9 = vector.extract_strided_slice %6 {offsets = [2, 0], sizes = [1, 32], strides = [1, 1]} : vector<6x32xf32> to vector<1x32xf32>
    %10 = vector.extract_strided_slice %6 {offsets = [3, 0], sizes = [1, 32], strides = [1, 1]} : vector<6x32xf32> to vector<1x32xf32>
    %11 = vector.extract_strided_slice %6 {offsets = [4, 0], sizes = [1, 32], strides = [1, 1]} : vector<6x32xf32> to vector<1x32xf32>
    %12 = vector.extract_strided_slice %6 {offsets = [5, 0], sizes = [1, 32], strides = [1, 1]} : vector<6x32xf32> to vector<1x32xf32>
    %c0_6 = arith.constant 0 : index
    %c0_7 = arith.constant 0 : index
    %c0_8 = arith.constant 0 : index
    %13 = vector.load %arg4[%c0_6, %c0_7, %c0_8] : memref<1x1x64xf32, #tpu.memory_space<vmem>>, vector<1x1x64xf32>
    %14 = vector.shape_cast %13 : vector<1x1x64xf32> to vector<1x64xf32>
    %cst = arith.constant dense<0.000000e+00> : vector<8xf32>
    %15 = vector.multi_reduction <add>, %4, %cst [1] : vector<8x32xf32> to vector<8xf32>
    %16 = vector.shape_cast %15 : vector<8xf32> to vector<8x1xf32>
    %cst_9 = arith.constant 3.200000e+01 : f32
    %17 = vector.broadcast %cst_9 : f32 to vector<8x1xf32>
    %18 = arith.divf %16, %17 : vector<8x1xf32>
    %19 = vector.broadcast %18 : vector<8x1xf32> to vector<8x32xf32>
    %20 = arith.subf %4, %19 : vector<8x32xf32>
    %21 = arith.mulf %20, %20 : vector<8x32xf32>
    %cst_10 = arith.constant dense<0.000000e+00> : vector<8xf32>
    %22 = vector.multi_reduction <add>, %21, %cst_10 [1] : vector<8x32xf32> to vector<8xf32>
    %23 = vector.shape_cast %22 : vector<8xf32> to vector<8x1xf32>
    %cst_11 = arith.constant 3.200000e+01 : f32
    %24 = vector.broadcast %cst_11 : f32 to vector<8x1xf32>
    %25 = arith.divf %23, %24 : vector<8x1xf32>
    %26 = vector.broadcast %18 : vector<8x1xf32> to vector<8x32xf32>
    %27 = arith.subf %4, %26 : vector<8x32xf32>
    %cst_12 = arith.constant 9.99999974E-6 : f32
    %28 = vector.broadcast %cst_12 : f32 to vector<8x1xf32>
    %29 = arith.addf %25, %28 : vector<8x1xf32>
    %30 = math.rsqrt %29 : vector<8x1xf32>
    %31 = vector.broadcast %30 : vector<8x1xf32> to vector<8x32xf32>
    %32 = arith.mulf %27, %31 : vector<8x32xf32>
    %33 = vector.broadcast %7 : vector<1x32xf32> to vector<8x32xf32>
    %34 = arith.mulf %32, %33 : vector<8x32xf32>
    %35 = vector.broadcast %8 : vector<1x32xf32> to vector<8x32xf32>
    %36 = arith.addf %34, %35 : vector<8x32xf32>
    %c0_13 = arith.constant 0 : index
    %c0_14 = arith.constant 0 : index
    %c0_15 = arith.constant 0 : index
    %37 = vector.load %arg5[%c0_13, %c0_14, %c0_15] : memref<1x96x32xf32, #tpu.memory_space<vmem>>, vector<1x96x32xf32>
    %38 = vector.shape_cast %37 : vector<1x96x32xf32> to vector<96x32xf32>
    %39 = tpu.transpose %36, [1, 0] : vector<8x32xf32> -> vector<32x8xf32>
    %cst_16 = arith.constant dense<0.000000e+00> : vector<96x8xf32>
    %40 = tpu.matmul %38, %39, %cst_16 {dimension_numbers = #tpu.dot_dimension_numbers<[1], [0], [0], [1], [0, 0, 1, 1], [], []>} : vector<96x32xf32>, vector<32x8xf32>, vector<96x8xf32> -> vector<96x8xf32>
    %41 = vector.extract_strided_slice %40 {offsets = [0, 0], sizes = [32, 8], strides = [1, 1]} : vector<96x8xf32> to vector<32x8xf32>
    %42 = vector.shape_cast %41 : vector<32x8xf32> to vector<4x8x8xf32>
    %43 = vector.extract_strided_slice %40 {offsets = [32, 0], sizes = [32, 8], strides = [1, 1]} : vector<96x8xf32> to vector<32x8xf32>
    %44 = vector.shape_cast %43 : vector<32x8xf32> to vector<4x8x8xf32>
    %45 = vector.extract_strided_slice %40 {offsets = [64, 0], sizes = [32, 8], strides = [1, 1]} : vector<96x8xf32> to vector<32x8xf32>
    %46 = vector.shape_cast %45 : vector<32x8xf32> to vector<4x8x8xf32>
    %47 = tpu.transpose %42, [0, 2, 1] : vector<4x8x8xf32> -> vector<4x8x8xf32>
    "tpu.trace_start"() <{level = 10 : i32, message = "hnd,hdm->hnm"}> : () -> ()
    %cst_17 = arith.constant dense<0.000000e+00> : vector<4x8x8xf32>
    %48 = tpu.matmul %47, %44, %cst_17 {dimension_numbers = #tpu.dot_dimension_numbers<[2], [1], [1], [2], [0, 0, 0, 1, 1, 2], [0], [0]>} : vector<4x8x8xf32>, vector<4x8x8xf32>, vector<4x8x8xf32> -> vector<4x8x8xf32>
    "tpu.trace_stop"() : () -> ()
    %cst_18 = arith.constant dense<0xFF800000> : vector<4x8xf32>
    %49 = vector.multi_reduction <maximumf>, %48, %cst_18 [2] : vector<4x8x8xf32> to vector<4x8xf32>
    %50 = vector.shape_cast %49 : vector<4x8xf32> to vector<4x8x1xf32>
    %51 = vector.broadcast %50 : vector<4x8x1xf32> to vector<4x8x8xf32>
    %52 = arith.subf %48, %51 : vector<4x8x8xf32>
    %53 = math.exp %52 : vector<4x8x8xf32>
    %cst_19 = arith.constant dense<0.000000e+00> : vector<4x8xf32>
    %54 = vector.multi_reduction <add>, %53, %cst_19 [2] : vector<4x8x8xf32> to vector<4x8xf32>
    %55 = vector.shape_cast %54 : vector<4x8xf32> to vector<4x8x1xf32>
    %56 = vector.broadcast %55 : vector<4x8x1xf32> to vector<4x8x8xf32>
    %57 = arith.divf %53, %56 : vector<4x8x8xf32>
    "tpu.trace_start"() <{level = 10 : i32, message = "hkj,hij->hki"}> : () -> ()
    %cst_20 = arith.constant dense<0.000000e+00> : vector<4x8x8xf32>
    %58 = tpu.matmul %46, %57, %cst_20 {dimension_numbers = #tpu.dot_dimension_numbers<[2], [2], [1], [1], [0, 0, 0, 1, 1, 1], [0], [0]>} : vector<4x8x8xf32>, vector<4x8x8xf32>, vector<4x8x8xf32> -> vector<4x8x8xf32>
    "tpu.trace_stop"() : () -> ()
    %c0_21 = arith.constant 0 : index
    %c0_22 = arith.constant 0 : index
    %c0_23 = arith.constant 0 : index
    %59 = vector.load %arg6[%c0_21, %c0_22, %c0_23] : memref<1x32x32xf32, #tpu.memory_space<vmem>>, vector<1x32x32xf32>
    %60 = vector.shape_cast %59 : vector<1x32x32xf32> to vector<32x32xf32>
    %61 = vector.shape_cast %58 : vector<4x8x8xf32> to vector<32x8xf32>
    %cst_24 = arith.constant dense<0.000000e+00> : vector<32x8xf32>
    %62 = tpu.matmul %60, %61, %cst_24 {dimension_numbers = #tpu.dot_dimension_numbers<[1], [0], [0], [1], [0, 0, 1, 1], [], []>} : vector<32x32xf32>, vector<32x8xf32>, vector<32x8xf32> -> vector<32x8xf32>
    %63 = tpu.transpose %62, [1, 0] : vector<32x8xf32> -> vector<8x32xf32>
    %64 = arith.addf %4, %63 : vector<8x32xf32>
    %65 = vector.broadcast %9 : vector<1x32xf32> to vector<8x32xf32>
    %66 = arith.addf %64, %65 : vector<8x32xf32>
    %cst_25 = arith.constant dense<0.000000e+00> : vector<8xf32>
    %67 = vector.multi_reduction <add>, %66, %cst_25 [1] : vector<8x32xf32> to vector<8xf32>
    %68 = vector.shape_cast %67 : vector<8xf32> to vector<8x1xf32>
    %cst_26 = arith.constant 3.200000e+01 : f32
    %69 = vector.broadcast %cst_26 : f32 to vector<8x1xf32>
    %70 = arith.divf %68, %69 : vector<8x1xf32>
    %71 = vector.broadcast %70 : vector<8x1xf32> to vector<8x32xf32>
    %72 = arith.subf %66, %71 : vector<8x32xf32>
    %73 = arith.mulf %72, %72 : vector<8x32xf32>
    %cst_27 = arith.constant dense<0.000000e+00> : vector<8xf32>
    %74 = vector.multi_reduction <add>, %73, %cst_27 [1] : vector<8x32xf32> to vector<8xf32>
    %75 = vector.shape_cast %74 : vector<8xf32> to vector<8x1xf32>
    %cst_28 = arith.constant 3.200000e+01 : f32
    %76 = vector.broadcast %cst_28 : f32 to vector<8x1xf32>
    %77 = arith.divf %75, %76 : vector<8x1xf32>
    %78 = vector.broadcast %70 : vector<8x1xf32> to vector<8x32xf32>
    %79 = arith.subf %66, %78 : vector<8x32xf32>
    %cst_29 = arith.constant 9.99999974E-6 : f32
    %80 = vector.broadcast %cst_29 : f32 to vector<8x1xf32>
    %81 = arith.addf %77, %80 : vector<8x1xf32>
    %82 = math.rsqrt %81 : vector<8x1xf32>
    %83 = vector.broadcast %82 : vector<8x1xf32> to vector<8x32xf32>
    %84 = arith.mulf %79, %83 : vector<8x32xf32>
    %85 = vector.broadcast %10 : vector<1x32xf32> to vector<8x32xf32>
    %86 = arith.mulf %84, %85 : vector<8x32xf32>
    %87 = vector.broadcast %11 : vector<1x32xf32> to vector<8x32xf32>
    %88 = arith.addf %86, %87 : vector<8x32xf32>
    %c0_30 = arith.constant 0 : index
    %c0_31 = arith.constant 0 : index
    %c0_32 = arith.constant 0 : index
    %89 = vector.load %arg7[%c0_30, %c0_31, %c0_32] : memref<1x32x64xf32, #tpu.memory_space<vmem>>, vector<1x32x64xf32>
    %90 = vector.shape_cast %89 : vector<1x32x64xf32> to vector<32x64xf32>
    %cst_33 = arith.constant dense<0.000000e+00> : vector<8x64xf32>
    %91 = tpu.matmul %88, %90, %cst_33 {dimension_numbers = #tpu.dot_dimension_numbers<[1], [0], [0], [1], [0, 0, 1, 1], [], []>} : vector<8x32xf32>, vector<32x64xf32>, vector<8x64xf32> -> vector<8x64xf32>
    %92 = vector.broadcast %14 : vector<1x64xf32> to vector<8x64xf32>
    %93 = arith.addf %91, %92 : vector<8x64xf32>
    %cst_34 = arith.constant 5.000000e-01 : f32
    %94 = vector.broadcast %cst_34 : f32 to vector<8x64xf32>
    %95 = arith.mulf %94, %93 : vector<8x64xf32>
    %cst_35 = arith.constant 0.707106769 : f32
    %96 = vector.broadcast %cst_35 : f32 to vector<8x64xf32>
    %97 = arith.mulf %93, %96 : vector<8x64xf32>
    %98 = math.erf %97 : vector<8x64xf32>
    %cst_36 = arith.constant 1.000000e+00 : f32
    %99 = vector.broadcast %cst_36 : f32 to vector<8x64xf32>
    %100 = arith.addf %99, %98 : vector<8x64xf32>
    %101 = arith.mulf %95, %100 : vector<8x64xf32>
    %c0_37 = arith.constant 0 : index
    %c0_38 = arith.constant 0 : index
    %c0_39 = arith.constant 0 : index
    %102 = vector.load %arg8[%c0_37, %c0_38, %c0_39] : memref<1x64x32xf32, #tpu.memory_space<vmem>>, vector<1x64x32xf32>
    %103 = vector.shape_cast %102 : vector<1x64x32xf32> to vector<64x32xf32>
    %cst_40 = arith.constant dense<0.000000e+00> : vector<8x32xf32>
    %104 = tpu.matmul %101, %103, %cst_40 {dimension_numbers = #tpu.dot_dimension_numbers<[1], [0], [0], [1], [0, 0, 1, 1], [], []>} : vector<8x64xf32>, vector<64x32xf32>, vector<8x32xf32> -> vector<8x32xf32>
    %105 = vector.broadcast %12 : vector<1x32xf32> to vector<8x32xf32>
    %106 = arith.addf %104, %105 : vector<8x32xf32>
    %107 = arith.addf %66, %106 : vector<8x32xf32>
    %c0_41 = arith.constant 0 : index
    %c0_42 = arith.constant 0 : index
    %c0_43 = arith.constant 0 : index
    %108 = vector.load %arg9[%c0_41, %c0_42, %c0_43] : memref<1x8x32xf32, #tpu.memory_space<vmem>>, vector<1x8x32xf32>
    %109 = vector.shape_cast %108 : vector<1x8x32xf32> to vector<8x32xf32>
    %110 = vector.shape_cast %107 : vector<8x32xf32> to vector<1x8x32xf32>
    tpu.vector_store %arg9[%c0_41, %c0_42, %c0_43], %110 {strides = array<i32>} : memref<1x8x32xf32, #tpu.memory_space<vmem>>, vector<1x8x32xf32>,
    return
  }
  func.func @transform_0(%arg0: i32, %arg1: i32) -> (i32, i32, i32) {
    %c0_i32 = arith.constant 0 : i32
    %c0_i32_0 = arith.constant 0 : i32
    %c0_i32_1 = arith.constant 0 : i32
    return %arg0, %c0_i32, %c0_i32_0 : i32, i32, i32
  }
  func.func @transform_1(%arg0: i32, %arg1: i32) -> (i32, i32, i32) {
    %c0_i32 = arith.constant 0 : i32
    %c0_i32_0 = arith.constant 0 : i32
    %c0_i32_1 = arith.constant 0 : i32
    return %arg1, %c0_i32, %c0_i32_0 : i32, i32, i32
  }
  func.func @transform_2(%arg0: i32, %arg1: i32) -> (i32, i32, i32) {
    %c0_i32 = arith.constant 0 : i32
    %c0_i32_0 = arith.constant 0 : i32
    %c0_i32_1 = arith.constant 0 : i32
    return %arg1, %c0_i32, %c0_i32_0 : i32, i32, i32
  }
  func.func @transform_3(%arg0: i32, %arg1: i32) -> (i32, i32, i32) {
    %c0_i32 = arith.constant 0 : i32
    %c0_i32_0 = arith.constant 0 : i32
    %c0_i32_1 = arith.constant 0 : i32
    return %arg1, %c0_i32, %c0_i32_0 : i32, i32, i32
  }
  func.func @transform_4(%arg0: i32, %arg1: i32) -> (i32, i32, i32) {
    %c0_i32 = arith.constant 0 : i32
    %c0_i32_0 = arith.constant 0 : i32
    %c0_i32_1 = arith.constant 0 : i32
    return %arg1, %c0_i32, %c0_i32_0 : i32, i32, i32
  }
  func.func @transform_5(%arg0: i32, %arg1: i32) -> (i32, i32, i32) {
    %c0_i32 = arith.constant 0 : i32
    %c0_i32_0 = arith.constant 0 : i32
    %c0_i32_1 = arith.constant 0 : i32
    return %arg1, %c0_i32, %c0_i32_0 : i32, i32, i32
  }
  func.func @transform_6(%arg0: i32, %arg1: i32) -> (i32, i32, i32) {
    %c0_i32 = arith.constant 0 : i32
    %c0_i32_0 = arith.constant 0 : i32
    %c0_i32_1 = arith.constant 0 : i32
    return %arg1, %c0_i32, %c0_i32_0 : i32, i32, i32
  }
  func.func @transform_7(%arg0: i32, %arg1: i32) -> (i32, i32, i32) {
    %c0_i32 = arith.constant 0 : i32
    %c0_i32_0 = arith.constant 0 : i32
    %c0_i32_1 = arith.constant 0 : i32
    return %arg0, %c0_i32, %c0_i32_0 : i32, i32, i32
  }
}

</mosaic_0001>

<llo_original>
// kernel: tpu_custom_call.1
$region0: #{tpu_custom_call.1}
  #allocation0 [shape = 'u32[]', space=smem, size = 0x4, offset = 0x4, fixed_abs, tag = 'smem constant byte address 0x4 - core index']
  #allocation1 [shape = 'u32[144,128]{1,0:T(1,128)}', space=vmem, size = 0x12000, scoped, tag = 'internal scratch']
  %s0 = inlined_call_operand.vmem [shape: f32[2,8,32], index: 0, kind: input, shape index: {}]
  %s1 = inlined_call_operand.vmem [shape: f32[2,6,32], index: 1, kind: input, shape index: {}]
  %s2 = inlined_call_operand.vmem [shape: f32[2,1,64], index: 2, kind: input, shape index: {}]
  %s3 = inlined_call_operand.vmem [shape: f32[2,96,32], index: 3, kind: input, shape index: {}]
  %s4 = inlined_call_operand.vmem [shape: f32[2,32,32], index: 4, kind: input, shape index: {}]
  %s5 = inlined_call_operand.vmem [shape: f32[2,32,64], index: 5, kind: input, shape index: {}]
  %s6 = inlined_call_operand.vmem [shape: f32[2,64,32], index: 6, kind: input, shape index: {}]
  %s7 = inlined_call_operand.hbm [shape: f32[2,8,32], index: 7, kind: output, shape index: {}]
  %s8 = sld [smem:[#allocation0]]
  $region65: #{tpu_custom_call.1} parent=0
    _
  %s10 = ssub.s32 1, %s8
  %s11 = scalar_select 0, %s10, %s8
  $region1: #{tpu_custom_call.1} parent=0
    #allocation2 [shape = 'u8[8192]{0}', space=vmem, size = 0x2000, scoped, tag = 'output window, operand 0']
    #allocation3 [shape = 's32[2]{0}', space=sflag, size = 0x8, scoped, tag = 'scoped memory for tpu_custom_call.1']
    %12 = vsyncpa [#allocation3], 0
    %s13 = scalar_lea.sflag [#allocation3], 1
    %14 = vsyncpa %s13, 0
    loop: start=0, step=1, limit=6
    $region2: #{tpu_custom_call.1} parent=1 // loop_pre_header
      _
    $region3: #{tpu_custom_call.1} parent=1 // loop_header
      %s16 = sphi 0, %s20
      %p17 = scmp.ge.s32.totalorder %s16, 6
      %s23 = sphi 0, %s35
      %s24 = sphi 0, %s31
      %s25 = sphi 0, %s23
      %s26 = sphi 0, %s24
      %s27 = sphi 0, %s25
      %s28 = sphi 0, %s26
      %s38 = sphi 0, %s40
      %s41 = sphi 0, %s38
      %s42 = sphi 0, %s41
      %s58 = sphi 0, %s42
      %s64 = sphi 0, %s66
      %s67 = sphi 0, %s64
      %s68 = sphi 0, %s67
      %s84 = sphi 0, %s68
      %s90 = sphi 0, %s92
      %s93 = sphi 0, %s90
      %s94 = sphi 0, %s93
      %s110 = sphi 0, %s94
      %s116 = sphi 0, %s118
      %s119 = sphi 0, %s116
      %s120 = sphi 0, %s119
      %s136 = sphi 0, %s120
      %s142 = sphi 0, %s144
      %s145 = sphi 0, %s142
      %s146 = sphi 0, %s145
      %s162 = sphi 0, %s146
      %s168 = sphi 0, %s170
      %s171 = sphi 0, %s168
      %s172 = sphi 0, %s171
      %s188 = sphi 0, %s172
      %s194 = sphi 0, %s196
      %s197 = sphi 0, %s194
      %s198 = sphi 0, %s197
      %s214 = sphi 0, %s198
      %s220 = sphi 0, %s222
      %s223 = sphi 0, %s220
      %s224 = sphi 0, %s223
      %s240 = sphi 0, %s224
    $region4: #{tpu_custom_call.1} parent=1 // loop_header_branch
      %19 = sbr.rel (%p17) target = $region8
    $region5: #{tpu_custom_call.1} parent=1 // loop_body
      %s21 = ssub.s32 %s16, 1
      %s22 = ssub.s32 %s16, 2
      %s29 = sadd.s32 1, %s24
      %p30 = scmp.ge.s32.totalorder %s29, 2
      %s31 = scalar_select %p30, 0, %s29
      %s32 = sadd.s32 1, %s23
      %s33 = scalar_select %p30, %s32, %s23
      %p34 = scmp.ge.s32.totalorder %s33, 2
      %s35 = scalar_select %p34, 0, %s33
      %s36 = ssub.s32 %s23, %s35
      %p37 = scmp.eq.s32.totalorder %s36, 0
      %s39 = sadd.s32 %s38, 1
      %s40 = scalar_select %p37, %s38, %s39
      %p43 = pneg %p37
      %p44 = scmp.eq.s32.totalorder %s16, 3
      %p45 = por %p43, %p44
      %p46 = scmp.ne.s32.totalorder %s38, %s41
      %p47 = scmp.eq.s32.totalorder %s16, 0
      %p48 = por %p46, %p47
      %p49 = scmp.ne.s32.totalorder %s38, %s41
      %p50 = scmp.eq.s32.totalorder %s21, 3
      %p51 = por %p49, %p50
      %p52 = scmp.ne.s32.totalorder %s41, %s42
      %p53 = scmp.eq.s32.totalorder %s21, 0
      %p54 = por %p52, %p53
      %p55 = scmp.ne.s32.totalorder %s41, %s42
      %p56 = scmp.eq.s32.totalorder %s22, 3
      %p57 = por %p55, %p56
      %p59 = scmp.ne.s32.totalorder %s42, %s58
      %p60 = scmp.eq.s32.totalorder %s22, 0
      %p61 = por %p59, %p60
      %s62 = ssub.s32 %s24, %s31
      %p63 = scmp.eq.s32.totalorder %s62, 0
      %s65 = sadd.s32 %s64, 1
      %s66 = scalar_select %p63, %s64, %s65
      %p69 = pneg %p63
      %p70 = scmp.eq.s32.totalorder %s16, 3
      %p71 = por %p69, %p70
      %p72 = scmp.ne.s32.totalorder %s64, %s67
      %p73 = scmp.eq.s32.totalorder %s16, 0
      %p74 = por %p72, %p73
      %p75 = scmp.ne.s32.totalorder %s64, %s67
      %p76 = scmp.eq.s32.totalorder %s21, 3
      %p77 = por %p75, %p76
      %p78 = scmp.ne.s32.totalorder %s67, %s68
      %p79 = scmp.eq.s32.totalorder %s21, 0
      %p80 = por %p78, %p79
      %p81 = scmp.ne.s32.totalorder %s67, %s68
      %p82 = scmp.eq.s32.totalorder %s22, 3
      %p83 = por %p81, %p82
      %p85 = scmp.ne.s32.totalorder %s68, %s84
      %p86 = scmp.eq.s32.totalorder %s22, 0
      %p87 = por %p85, %p86
      %s88 = ssub.s32 %s24, %s31
      %p89 = scmp.eq.s32.totalorder %s88, 0
      %s91 = sadd.s32 %s90, 1
      %s92 = scalar_select %p89, %s90, %s91
      %p95 = pneg %p89
      %p96 = scmp.eq.s32.totalorder %s16, 3
      %p97 = por %p95, %p96
      %p98 = scmp.ne.s32.totalorder %s90, %s93
      %p99 = scmp.eq.s32.totalorder %s16, 0
      %p100 = por %p98, %p99
      %p101 = scmp.ne.s32.totalorder %s90, %s93
      %p102 = scmp.eq.s32.totalorder %s21, 3
      %p103 = por %p101, %p102
      %p104 = scmp.ne.s32.totalorder %s93, %s94
      %p105 = scmp.eq.s32.totalorder %s21, 0
      %p106 = por %p104, %p105
      %p107 = scmp.ne.s32.totalorder %s93, %s94
      %p108 = scmp.eq.s32.totalorder %s22, 3
      %p109 = por %p107, %p108
      %p111 = scmp.ne.s32.totalorder %s94, %s110
      %p112 = scmp.eq.s32.totalorder %s22, 0
      %p113 = por %p111, %p112
      %s114 = ssub.s32 %s24, %s31
      %p115 = scmp.eq.s32.totalorder %s114, 0
      %s117 = sadd.s32 %s116, 1
      %s118 = scalar_select %p115, %s116, %s117
      %p121 = pneg %p115
      %p122 = scmp.eq.s32.totalorder %s16, 3
      %p123 = por %p121, %p122
      %p124 = scmp.ne.s32.totalorder %s116, %s119
      %p125 = scmp.eq.s32.totalorder %s16, 0
      %p126 = por %p124, %p125
      %p127 = scmp.ne.s32.totalorder %s116, %s119
      %p128 = scmp.eq.s32.totalorder %s21, 3
      %p129 = por %p127, %p128
      %p130 = scmp.ne.s32.totalorder %s119, %s120
      %p131 = scmp.eq.s32.totalorder %s21, 0
      %p132 = por %p130, %p131
      %p133 = scmp.ne.s32.totalorder %s119, %s120
      %p134 = scmp.eq.s32.totalorder %s22, 3
      %p135 = por %p133, %p134
      %p137 = scmp.ne.s32.totalorder %s120, %s136
      %p138 = scmp.eq.s32.totalorder %s22, 0
      %p139 = por %p137, %p138
      %s140 = ssub.s32 %s24, %s31
      %p141 = scmp.eq.s32.totalorder %s140, 0
      %s143 = sadd.s32 %s142, 1
      %s144 = scalar_select %p141, %s142, %s143
      %p147 = pneg %p141
      %p148 = scmp.eq.s32.totalorder %s16, 3
      %p149 = por %p147, %p148
      %p150 = scmp.ne.s32.totalorder %s142, %s145
      %p151 = scmp.eq.s32.totalorder %s16, 0
      %p152 = por %p150, %p151
      %p153 = scmp.ne.s32.totalorder %s142, %s145
      %p154 = scmp.eq.s32.totalorder %s21, 3
      %p155 = por %p153, %p154
      %p156 = scmp.ne.s32.totalorder %s145, %s146
      %p157 = scmp.eq.s32.totalorder %s21, 0
      %p158 = por %p156, %p157
      %p159 = scmp.ne.s32.totalorder %s145, %s146
      %p160 = scmp.eq.s32.totalorder %s22, 3
      %p161 = por %p159, %p160
      %p163 = scmp.ne.s32.totalorder %s146, %s162
      %p164 = scmp.eq.s32.totalorder %s22, 0
      %p165 = por %p163, %p164
      %s166 = ssub.s32 %s24, %s31
      %p167 = scmp.eq.s32.totalorder %s166, 0
      %s169 = sadd.s32 %s168, 1
      %s170 = scalar_select %p167, %s168, %s169
      %p173 = pneg %p167
      %p174 = scmp.eq.s32.totalorder %s16, 3
      %p175 = por %p173, %p174
      %p176 = scmp.ne.s32.totalorder %s168, %s171
      %p177 = scmp.eq.s32.totalorder %s16, 0
      %p178 = por %p176, %p177
      %p179 = scmp.ne.s32.totalorder %s168, %s171
      %p180 = scmp.eq.s32.totalorder %s21, 3
      %p181 = por %p179, %p180
      %p182 = scmp.ne.s32.totalorder %s171, %s172
      %p183 = scmp.eq.s32.totalorder %s21, 0
      %p184 = por %p182, %p183
      %p185 = scmp.ne.s32.totalorder %s171, %s172
      %p186 = scmp.eq.s32.totalorder %s22, 3
      %p187 = por %p185, %p186
      %p189 = scmp.ne.s32.totalorder %s172, %s188
      %p190 = scmp.eq.s32.totalorder %s22, 0
      %p191 = por %p189, %p190
      %s192 = ssub.s32 %s24, %s31
      %p193 = scmp.eq.s32.totalorder %s192, 0
      %s195 = sadd.s32 %s194, 1
      %s196 = scalar_select %p193, %s194, %s195
      %p199 = pneg %p193
      %p200 = scmp.eq.s32.totalorder %s16, 3
      %p201 = por %p199, %p200
      %p202 = scmp.ne.s32.totalorder %s194, %s197
      %p203 = scmp.eq.s32.totalorder %s16, 0
      %p204 = por %p202, %p203
      %p205 = scmp.ne.s32.totalorder %s194, %s197
      %p206 = scmp.eq.s32.totalorder %s21, 3
      %p207 = por %p205, %p206
      %p208 = scmp.ne.s32.totalorder %s197, %s198
      %p209 = scmp.eq.s32.totalorder %s21, 0
      %p210 = por %p208, %p209
      %p211 = scmp.ne.s32.totalorder %s197, %s198
      %p212 = scmp.eq.s32.totalorder %s22, 3
      %p213 = por %p211, %p212
      %p215 = scmp.ne.s32.totalorder %s198, %s214
      %p216 = scmp.eq.s32.totalorder %s22, 0
      %p217 = por %p215, %p216
      %s218 = ssub.s32 %s23, %s35
      %p219 = scmp.eq.s32.totalorder %s218, 0
      %s221 = sadd.s32 %s220, 1
      %s222 = scalar_select %p219, %s220, %s221
      %p225 = pneg %p219
      %p226 = scmp.eq.s32.totalorder %s16, 3
      %p227 = por %p225, %p226
      %p228 = scmp.ne.s32.totalorder %s220, %s223
      %p229 = scmp.eq.s32.totalorder %s16, 0
      %p230 = por %p228, %p229
      %p231 = scmp.ne.s32.totalorder %s220, %s223
      %p232 = scmp.eq.s32.totalorder %s21, 3
      %p233 = por %p231, %p232
      %p234 = scmp.ne.s32.totalorder %s223, %s224
      %p235 = scmp.eq.s32.totalorder %s21, 0
      %p236 = por %p234, %p235
      %p237 = scmp.ne.s32.totalorder %s223, %s224
      %p238 = scmp.eq.s32.totalorder %s22, 3
      %p239 = por %p237, %p238
      %p241 = scmp.ne.s32.totalorder %s224, %s240
      %p242 = scmp.eq.s32.totalorder %s22, 0
      %p243 = por %p241, %p242
      %p244 = scmp.le.s32.totalorder 1, %s16
      %p245 = scmp.lt.s32.totalorder %s16, 5
      %p246 = pnand %p244, %p245
      %p247 = pneg %p246
      // Predicated region
      $region9: #{tpu_custom_call.1} parent=5 // pred_check
        _
      $region10: #{tpu_custom_call.1} parent=5 // pred_check_branch
        %249 = sbr.rel (%p246) target = $region12
      $region11: #{tpu_custom_call.1} parent=5 // pred_region
        %s250 = ssub.s32 %s16, 1
      $region12: #{tpu_custom_call.1} parent=5 // pred_fallthru
        _
      %p251 = scmp.lt.s32.totalorder %s16, 4
      // Predicated region
      $region13: #{tpu_custom_call.1} parent=5 // pred_check
        %p252 = pneg %p251
      $region14: #{tpu_custom_call.1} parent=5 // pred_check_branch
        %254 = sbr.rel (%p252) target = $region16
      $region15: #{tpu_custom_call.1} parent=5 // pred_region
        // Predicated region
        $region17: #{tpu_custom_call.1} parent=15 // pred_check
          %p255 = pneg %p48
        $region18: #{tpu_custom_call.1} parent=15 // pred_check_branch
          %257 = sbr.rel (%p255) target = $region20
        $region19: #{tpu_custom_call.1} parent=15 // pred_region
          %p258 = scmp.lt.s32.totalorder %s23, 1
          %s259 = scalar_select %p258, %s23, 1
          %s260 = smul.addr %s259, 8
          %s261 = scalar_lea.vmem %s0, %s260
        $region20: #{tpu_custom_call.1} parent=15 // pred_fallthru
          _
        // Predicated region
        $region21: #{tpu_custom_call.1} parent=15 // pred_check
          %p262 = pneg %p74
        $region22: #{tpu_custom_call.1} parent=15 // pred_check_branch
          %264 = sbr.rel (%p262) target = $region24
        $region23: #{tpu_custom_call.1} parent=15 // pred_region
          %p265 = scmp.lt.s32.totalorder %s24, 1
          %s266 = scalar_select %p265, %s24, 1
          %s267 = smul.addr %s266, 8
          %s268 = scalar_lea.vmem %s1, %s267
        $region24: #{tpu_custom_call.1} parent=15 // pred_fallthru
          _
        // Predicated region
        $region25: #{tpu_custom_call.1} parent=15 // pred_check
          %p269 = pneg %p100
        $region26: #{tpu_custom_call.1} parent=15 // pred_check_branch
          %271 = sbr.rel (%p269) target = $region28
        $region27: #{tpu_custom_call.1} parent=15 // pred_region
          %p272 = scmp.lt.s32.totalorder %s24, 1
          %s273 = scalar_select %p272, %s24, 1
          %s274 = scalar_lea.vmem %s2, %s273
        $region28: #{tpu_custom_call.1} parent=15 // pred_fallthru
          _
        // Predicated region
        $region29: #{tpu_custom_call.1} parent=15 // pred_check
          %p275 = pneg %p126
        $region30: #{tpu_custom_call.1} parent=15 // pred_check_branch
          %277 = sbr.rel (%p275) target = $region32
        $region31: #{tpu_custom_call.1} parent=15 // pred_region
          %p278 = scmp.lt.s32.totalorder %s24, 1
          %s279 = scalar_select %p278, %s24, 1
          %s280 = smul.addr %s279, 12
          %s281 = smul.addr %s280, 8
          %s282 = scalar_lea.vmem %s3, %s281
        $region32: #{tpu_custom_call.1} parent=15 // pred_fallthru
          _
        // Predicated region
        $region33: #{tpu_custom_call.1} parent=15 // pred_check
          %p283 = pneg %p152
        $region34: #{tpu_custom_call.1} parent=15 // pred_check_branch
          %285 = sbr.rel (%p283) target = $region36
        $region35: #{tpu_custom_call.1} parent=15 // pred_region
          %p286 = scmp.lt.s32.totalorder %s24, 1
          %s287 = scalar_select %p286, %s24, 1
          %s288 = smul.addr %s287, 4
          %s289 = smul.addr %s288, 8
          %s290 = scalar_lea.vmem %s4, %s289
        $region36: #{tpu_custom_call.1} parent=15 // pred_fallthru
          _
        // Predicated region
        $region37: #{tpu_custom_call.1} parent=15 // pred_check
          %p291 = pneg %p178
        $region38: #{tpu_custom_call.1} parent=15 // pred_check_branch
          %293 = sbr.rel (%p291) target = $region40
        $region39: #{tpu_custom_call.1} parent=15 // pred_region
          %p294 = scmp.lt.s32.totalorder %s24, 1
          %s295 = scalar_select %p294, %s24, 1
          %s296 = smul.addr %s295, 4
          %s297 = smul.addr %s296, 8
          %s298 = scalar_lea.vmem %s5, %s297
        $region40: #{tpu_custom_call.1} parent=15 // pred_fallthru
          _
        // Predicated region
        $region41: #{tpu_custom_call.1} parent=15 // pred_check
          %p299 = pneg %p204
        $region42: #{tpu_custom_call.1} parent=15 // pred_check_branch
          %301 = sbr.rel (%p299) target = $region44
        $region43: #{tpu_custom_call.1} parent=15 // pred_region
          %p302 = scmp.lt.s32.totalorder %s24, 1
          %s303 = scalar_select %p302, %s24, 1
          %s304 = smul.addr %s303, 8
          %s305 = smul.addr %s304, 8
          %s306 = scalar_lea.vmem %s6, %s305
        $region44: #{tpu_custom_call.1} parent=15 // pred_fallthru
          _
      $region16: #{tpu_custom_call.1} parent=5 // pred_fallthru
        _
      %p307 = scmp.le.s32.totalorder 1, %s16
      %p308 = scmp.lt.s32.totalorder %s16, 5
      %p309 = pnand %p307, %p308
      %p310 = pneg %p309
      // Predicated region
      $region45: #{tpu_custom_call.1} parent=5 // pred_check
        _
      $region46: #{tpu_custom_call.1} parent=5 // pred_check_branch
        %312 = sbr.rel (%p309) target = $region48
      $region47: #{tpu_custom_call.1} parent=5 // pred_region
        %s313 = ssub.s32 %s16, 1
        %p314 = scmp.lt.s32.totalorder %s25, 1
        %s315 = scalar_select %p314, %s25, 1
        %s316 = smul.addr %s315, 8
        %s317 = scalar_lea.vmem %s0, %s316
        %p318 = pneg %p54
        %p319 = pneg %p51
        %p320 = scmp.lt.s32.totalorder %s26, 1
        %s321 = scalar_select %p320, %s26, 1
        %s322 = smul.addr %s321, 8
        %s323 = scalar_lea.vmem %s1, %s322
        %p324 = pneg %p80
        %p325 = pneg %p77
        %p326 = scmp.lt.s32.totalorder %s26, 1
        %s327 = scalar_select %p326, %s26, 1
        %s328 = scalar_lea.vmem %s2, %s327
        %p329 = pneg %p106
        %p330 = pneg %p103
        %p331 = scmp.lt.s32.totalorder %s26, 1
        %s332 = scalar_select %p331, %s26, 1
        %s333 = smul.addr %s332, 12
        %s334 = smul.addr %s333, 8
        %s335 = scalar_lea.vmem %s3, %s334
        %p336 = pneg %p132
        %p337 = pneg %p129
        %p338 = scmp.lt.s32.totalorder %s26, 1
        %s339 = scalar_select %p338, %s26, 1
        %s340 = smul.addr %s339, 4
        %s341 = smul.addr %s340, 8
        %s342 = scalar_lea.vmem %s4, %s341
        %p343 = pneg %p158
        %p344 = pneg %p155
        %p345 = scmp.lt.s32.totalorder %s26, 1
        %s346 = scalar_select %p345, %s26, 1
        %s347 = smul.addr %s346, 4
        %s348 = smul.addr %s347, 8
        %s349 = scalar_lea.vmem %s5, %s348
        %p350 = pneg %p184
        %p351 = pneg %p181
        %p352 = scmp.lt.s32.totalorder %s26, 1
        %s353 = scalar_select %p352, %s26, 1
        %s354 = smul.addr %s353, 8
        %s355 = smul.addr %s354, 8
        %s356 = scalar_lea.vmem %s6, %s355
        %p357 = pneg %p210
        %p358 = pneg %p207
        %p359 = pneg %p236
        %p360 = pneg %p233
        %s361 = sand.u32 %s223, 1
        %s362 = scalar_lea.sflag [#allocation3], %s361
        %s363 = sand.u32 %s223, 1
        %s364 = smul.addr %s363, 8
        %s365 = scalar_lea.vmem [#allocation2], %s364
        %p366 = scmp.lt.s32.totalorder %s25, 1
        %s367 = scalar_select %p366, %s25, 1
        %s368 = smul.addr %s367, 8
        %s369 = scalar_lea.vmem %s0, %s368
        %p370 = scmp.lt.s32.totalorder %s26, 1
        %s371 = scalar_select %p370, %s26, 1
        %s372 = smul.addr %s371, 8
        %s373 = scalar_lea.vmem %s1, %s372
        %p374 = scmp.lt.s32.totalorder %s26, 1
        %s375 = scalar_select %p374, %s26, 1
        %s376 = scalar_lea.vmem %s2, %s375
        %p377 = scmp.lt.s32.totalorder %s26, 1
        %s378 = scalar_select %p377, %s26, 1
        %s379 = smul.addr %s378, 12
        %s380 = smul.addr %s379, 8
        %s381 = scalar_lea.vmem %s3, %s380
        %p382 = scmp.lt.s32.totalorder %s26, 1
        %s383 = scalar_select %p382, %s26, 1
        %s384 = smul.addr %s383, 4
        %s385 = smul.addr %s384, 8
        %s386 = scalar_lea.vmem %s4, %s385
        %p387 = scmp.lt.s32.totalorder %s26, 1
        %s388 = scalar_select %p387, %s26, 1
        %s389 = smul.addr %s388, 4
        %s390 = smul.addr %s389, 8
        %s391 = scalar_lea.vmem %s5, %s390
        %p392 = scmp.lt.s32.totalorder %s26, 1
        %s393 = scalar_select %p392, %s26, 1
        %s394 = smul.addr %s393, 8
        %s395 = smul.addr %s394, 8
        %s396 = scalar_lea.vmem %s6, %s395
        %p397 = scmp.eq.s32.totalorder %s26, 0
        // Predicated region
        $region49: #{tpu_custom_call.1} parent=47 // pred_check
          %p398 = pneg %p397
        $region50: #{tpu_custom_call.1} parent=47 // pred_check_branch
          %400 = sbr.rel (%p398) target = $region52
        $region51: #{tpu_custom_call.1} parent=47 // pred_region
          %v401 = vld [vmem:[%s369] sm:$0xff]
          %vm402 = vcmask 261120
          %403 = vst.msk [vmem:[%s365] sm:$0xff] %vm402, %v401
        $region52: #{tpu_custom_call.1} parent=47 // pred_fallthru
          _
        %v404 = vld [vmem:[%s365] sm:$0xff]
        %v405 = vld [vmem:[%s373] sm:$0x3f]
        %v406 = vld [vmem:[%s376] sm:$0x1]
        %vm407 = vcmask 261120
        %v408 = vsel %vm407, %v404, 0.0
        %409 = vadd.xlane.f32.xlu0 %v408
        %v410 = vpop.xlane.xlu0 %409
        %v411 = vrcp.pop 32.0
        %v412 = vmul.f32 %v410, %v411
        %v413 = vsub.f32 %v404, %v412
        %v414 = vmul.f32 %v413, %v413
        %v415 = vsel %vm407, %v414, 0.0
        %416 = vadd.xlane.f32.xlu0 %v415
        %v417 = vpop.xlane.xlu0 %416
        %v418 = vmul.f32 %v417, %v411
        %v419 = vadd.f32 %v418, 1e-05
        %v420 = vrsqrt.pop %v419
        %v421 = vmul.f32 %v413, %v420
        %v422 = vlaneseq
        %v423 = vshrl.u32 %v422, 7
        %v424 = vsub.s32 0, %v423
        %v425 = vrot.slane %v405, %v424
        %v426 = vmul.f32 %v421, %v425
        %v427 = vlaneseq
        %v428 = vshrl.u32 %v427, 7
        %v429 = vsub.s32 1, %v428
        %v430 = vrot.slane %v405, %v429
        %v431 = vadd.f32 %v426, %v430
        %v432 = vld [vmem:[%s381] sm:$0xff]
        %v433 = vld [vmem:[%s381 + $0x8] sm:$0xff]
        %v434 = vld [vmem:[%s381 + $0x10] sm:$0xff]
        %v435 = vld [vmem:[%s381 + $0x18] sm:$0xff]
        %v436 = vld [vmem:[%s381 + $0x20] sm:$0xff]
        %v437 = vld [vmem:[%s381 + $0x28] sm:$0xff]
        %v438 = vld [vmem:[%s381 + $0x30] sm:$0xff]
        %v439 = vld [vmem:[%s381 + $0x38] sm:$0xff]
        %v440 = vld [vmem:[%s381 + $0x40] sm:$0xff]
        %v441 = vld [vmem:[%s381 + $0x48] sm:$0xff]
        %v442 = vld [vmem:[%s381 + $0x50] sm:$0xff]
        %v443 = vld [vmem:[%s381 + $0x58] sm:$0xff]
        %v445 = vsel %vm407, %v432, 0
        %v448 = vsel %vm407, %v433, 0
        %v451 = vsel %vm407, %v434, 0
        %v454 = vsel %vm407, %v435, 0
        %v457 = vsel %vm407, %v436, 0
        %v460 = vsel %vm407, %v437, 0
        %v463 = vsel %vm407, %v438, 0
        %v466 = vsel %vm407, %v439, 0
        %v469 = vsel %vm407, %v440, 0
        %v472 = vsel %vm407, %v441, 0
        %v475 = vsel %vm407, %v442, 0
        %v478 = vsel %vm407, %v443, 0
        %v481 = vsel %vm407, %v431, 0
        %483 = vmatprep.subr.mxu0 0.0
        %484 = vmatpush1.xpose.msra.mxu0 %v481
        %485 = vmatprep.subr.mxu0 0.0
        %486 = vmatpush1.xpose.msra.mxu0 0.0
        %487 = vmatprep.subr.mxu0 0.0
        %488 = vmatpush1.xpose.msra.mxu0 0.0
        %489 = vmatprep.subr.mxu0 0.0
        %490 = vmatpush1.xpose.msra.mxu0 0.0
        %491 = vmatprep.subr.mxu0 0.0
        %492 = vmatpush1.xpose.msra.mxu0 0.0
        %493 = vmatprep.subr.mxu0 0.0
        %494 = vmatpush1.xpose.msra.mxu0 0.0
        %495 = vmatprep.subr.mxu0 0.0
        %496 = vmatpush1.xpose.msra.mxu0 0.0
        %497 = vmatprep.subr.mxu0 0.0
        %498 = vmatpush1.xpose.msra.mxu0 0.0
        %499 = vmatprep.subr.mxu0 0.0
        %500 = vmatpush1.xpose.msra.mxu0 0.0
        %501 = vmatprep.subr.mxu0 0.0
        %502 = vmatpush1.xpose.msra.mxu0 0.0
        %503 = vmatprep.subr.mxu0 0.0
        %504 = vmatpush1.xpose.msra.mxu0 0.0
        %505 = vmatprep.subr.mxu0 0.0
        %506 = vmatpush1.xpose.msra.mxu0 0.0
        %507 = vmatprep.subr.mxu0 0.0
        %508 = vmatpush1.xpose.msra.mxu0 0.0
        %509 = vmatprep.subr.mxu0 0.0
        %510 = vmatpush1.xpose.msra.mxu0 0.0
        %511 = vmatprep.subr.mxu0 0.0
        %512 = vmatpush1.xpose.msra.mxu0 0.0
        %513 = vmatprep.subr.mxu0 0.0
        %514 = vmatpush1.xpose.msra.mxu0 0.0
        %515 = vmatprep.subr.mxu0 0.0
        %516 = vmatpush1.xpose.msra.mxu0 0.0
        %517 = vmatprep.subr.mxu0 0.0
        %518 = vmatpush1.xpose.msra.mxu0 0.0
        %519 = vmatprep.subr.mxu0 0.0
        %520 = vmatpush1.xpose.msra.mxu0 0.0
        %521 = vmatprep.subr.mxu0 0.0
        %522 = vmatpush1.xpose.msra.mxu0 0.0
        %523 = vmatprep.subr.mxu0 0.0
        %524 = vmatpush1.xpose.msra.mxu0 0.0
        %525 = vmatprep.subr.mxu0 0.0
        %526 = vmatpush1.xpose.msra.mxu0 0.0
        %527 = vmatprep.subr.mxu0 0.0
        %528 = vmatpush1.xpose.msra.mxu0 0.0
        %529 = vmatprep.subr.mxu0 0.0
        %530 = vmatpush1.xpose.msra.mxu0 0.0
        %531 = vmatprep.subr.mxu0 0.0
        %532 = vmatpush1.xpose.msra.mxu0 0.0
        %533 = vmatprep.subr.mxu0 0.0
        %534 = vmatpush1.xpose.msra.mxu0 0.0
        %535 = vmatprep.subr.mxu0 0.0
        %536 = vmatpush1.xpose.msra.mxu0 0.0
        %537 = vmatprep.subr.mxu0 0.0
        %538 = vmatpush1.xpose.msra.mxu0 0.0
        %539 = vmatprep.subr.mxu0 0.0
        %540 = vmatpush1.xpose.msra.mxu0 0.0
        %541 = vmatprep.subr.mxu0 0.0
        %542 = vmatpush1.xpose.msra.mxu0 0.0
        %543 = vmatprep.subr.mxu0 0.0
        %544 = vmatpush1.xpose.msra.mxu0 0.0
        %545 = vmatprep.subr.mxu0 0.0
        %546 = vmatpush1.xpose.msra.mxu0 0.0
        %547 = vmatprep.mubr.f32.mxu0 0.0
        %548 = vmatmul.mubr.f32.gmra.mrb[0].mxu0 %v445
        %v549 = vpop.f32.mrb[0].mxu0
        %v550 = vadd.f32 0.0, %v549
        %v551 = vpop.f32.mrb[0].mxu0
        %552 = vmatprep.mubr.f32.mxu0 0.0
        %553 = vmatmul.mubr.f32.gmra.mrb[0].mxu0 %v448
        %v554 = vpop.f32.mrb[0].mxu0
        %v555 = vadd.f32 0.0, %v554
        %v556 = vpop.f32.mrb[0].mxu0
        %557 = vmatprep.mubr.f32.mxu0 0.0
        %558 = vmatmul.mubr.f32.gmra.mrb[0].mxu0 %v451
        %v559 = vpop.f32.mrb[0].mxu0
        %v560 = vadd.f32 0.0, %v559
        %v561 = vpop.f32.mrb[0].mxu0
        %562 = vmatprep.mubr.f32.mxu0 0.0
        %563 = vmatmul.mubr.f32.gmra.mrb[0].mxu0 %v454
        %v564 = vpop.f32.mrb[0].mxu0
        %v565 = vadd.f32 0.0, %v564
        %v566 = vpop.f32.mrb[0].mxu0
        %567 = vmatprep.mubr.f32.mxu0 0.0
        %568 = vmatmul.mubr.f32.gmra.mrb[0].mxu0 %v457
        %v569 = vpop.f32.mrb[0].mxu0
        %v570 = vadd.f32 0.0, %v569
        %v571 = vpop.f32.mrb[0].mxu0
        %572 = vmatprep.mubr.f32.mxu0 0.0
        %573 = vmatmul.mubr.f32.gmra.mrb[0].mxu0 %v460
        %v574 = vpop.f32.mrb[0].mxu0
        %v575 = vadd.f32 0.0, %v574
        %v576 = vpop.f32.mrb[0].mxu0
        %577 = vmatprep.mubr.f32.mxu0 0.0
        %578 = vmatmul.mubr.f32.gmra.mrb[0].mxu0 %v463
        %v579 = vpop.f32.mrb[0].mxu0
        %v580 = vadd.f32 0.0, %v579
        %v581 = vpop.f32.mrb[0].mxu0
        %582 = vmatprep.mubr.f32.mxu0 0.0
        %583 = vmatmul.mubr.f32.gmra.mrb[0].mxu0 %v466
        %v584 = vpop.f32.mrb[0].mxu0
        %v585 = vadd.f32 0.0, %v584
        %v586 = vpop.f32.mrb[0].mxu0
        %587 = vmatprep.mubr.f32.mxu0 0.0
        %588 = vmatmul.mubr.f32.gmra.mrb[0].mxu0 %v469
        %v589 = vpop.f32.mrb[0].mxu0
        %v590 = vadd.f32 0.0, %v589
        %v591 = vpop.f32.mrb[0].mxu0
        %592 = vmatprep.mubr.f32.mxu0 0.0
        %593 = vmatmul.mubr.f32.gmra.mrb[0].mxu0 %v472
        %v594 = vpop.f32.mrb[0].mxu0
        %v595 = vadd.f32 0.0, %v594
        %v596 = vpop.f32.mrb[0].mxu0
        %597 = vmatprep.mubr.f32.mxu0 0.0
        %598 = vmatmul.mubr.f32.gmra.mrb[0].mxu0 %v475
        %v599 = vpop.f32.mrb[0].mxu0
        %v600 = vadd.f32 0.0, %v599
        %v601 = vpop.f32.mrb[0].mxu0
        %602 = vmatprep.mubr.f32.mxu0 0.0
        %603 = vmatmul.mubr.f32.gmra.mrb[0].mxu0 %v478
        %v604 = vpop.f32.mrb[0].mxu0
        %v605 = vadd.f32 0.0, %v604
        %v606 = vpop.f32.mrb[0].mxu0
        %607 = vdwg.mxu0
        %608 = vxpose.xlu0.b32.start [1/16] %v550, 128
        %609 = vxpose.xlu0.b32.cont [2/16] 0.0, 128
        %610 = vxpose.xlu0.b32.cont [3/16] 0.0, 128
        %611 = vxpose.xlu0.b32.cont [4/16] 0.0, 128
        %612 = vxpose.xlu0.b32.cont [5/16] 0.0, 128
        %613 = vxpose.xlu0.b32.cont [6/16] 0.0, 128
        %614 = vxpose.xlu0.b32.cont [7/16] 0.0, 128
        %615 = vxpose.xlu0.b32.cont [8/16] 0.0, 128
        %616 = vxpose.xlu0.b32.cont [9/16] 0.0, 128
        %617 = vxpose.xlu0.b32.cont [10/16] 0.0, 128
        %618 = vxpose.xlu0.b32.cont [11/16] 0.0, 128
        %619 = vxpose.xlu0.b32.cont [12/16] 0.0, 128
        %620 = vxpose.xlu0.b32.cont [13/16] 0.0, 128
        %621 = vxpose.xlu0.b32.cont [14/16] 0.0, 128
        %622 = vxpose.xlu0.b32.cont [15/16] 0.0, 128
        %623 = vxpose.xlu0.b32.end [16/16] 0.0, 128
        %v624 = vpop.trf.xlu0
        %v625 = vpop.trf.xlu0
        %v626 = vpop.trf.xlu0
        %v627 = vpop.trf.xlu0
        %v628 = vpop.trf.xlu0
        %v629 = vpop.trf.xlu0
        %v630 = vpop.trf.xlu0
        %v631 = vpop.trf.xlu0
        %v632 = vpop.trf.xlu0
        %v633 = vpop.trf.xlu0
        %v634 = vpop.trf.xlu0
        %v635 = vpop.trf.xlu0
        %v636 = vpop.trf.xlu0
        %v637 = vpop.trf.xlu0
        %v638 = vpop.trf.xlu0
        %v639 = vpop.trf.xlu0
        %640 = vxpose.xlu0.b32.start [1/16] %v555, 128
        %641 = vxpose.xlu0.b32.cont [2/16] 0.0, 128
        %642 = vxpose.xlu0.b32.cont [3/16] 0.0, 128
        %643 = vxpose.xlu0.b32.cont [4/16] 0.0, 128
        %644 = vxpose.xlu0.b32.cont [5/16] 0.0, 128
        %645 = vxpose.xlu0.b32.cont [6/16] 0.0, 128
        %646 = vxpose.xlu0.b32.cont [7/16] 0.0, 128
        %647 = vxpose.xlu0.b32.cont [8/16] 0.0, 128
        %648 = vxpose.xlu0.b32.cont [9/16] 0.0, 128
        %649 = vxpose.xlu0.b32.cont [10/16] 0.0, 128
        %650 = vxpose.xlu0.b32.cont [11/16] 0.0, 128
        %651 = vxpose.xlu0.b32.cont [12/16] 0.0, 128
        %652 = vxpose.xlu0.b32.cont [13/16] 0.0, 128
        %653 = vxpose.xlu0.b32.cont [14/16] 0.0, 128
        %654 = vxpose.xlu0.b32.cont [15/16] 0.0, 128
        %655 = vxpose.xlu0.b32.end [16/16] 0.0, 128
        %v656 = vpop.trf.xlu0
        %v657 = vpop.trf.xlu0
        %v658 = vpop.trf.xlu0
        %v659 = vpop.trf.xlu0
        %v660 = vpop.trf.xlu0
        %v661 = vpop.trf.xlu0
        %v662 = vpop.trf.xlu0
        %v663 = vpop.trf.xlu0
        %v664 = vpop.trf.xlu0
        %v665 = vpop.trf.xlu0
        %v666 = vpop.trf.xlu0
        %v667 = vpop.trf.xlu0
        %v668 = vpop.trf.xlu0
        %v669 = vpop.trf.xlu0
        %v670 = vpop.trf.xlu0
        %v671 = vpop.trf.xlu0
        %672 = vxpose.xlu0.b32.start [1/16] %v560, 128
        %673 = vxpose.xlu0.b32.cont [2/16] 0.0, 128
        %674 = vxpose.xlu0.b32.cont [3/16] 0.0, 128
        %675 = vxpose.xlu0.b32.cont [4/16] 0.0, 128
        %676 = vxpose.xlu0.b32.cont [5/16] 0.0, 128
        %677 = vxpose.xlu0.b32.cont [6/16] 0.0, 128
        %678 = vxpose.xlu0.b32.cont [7/16] 0.0, 128
        %679 = vxpose.xlu0.b32.cont [8/16] 0.0, 128
        %680 = vxpose.xlu0.b32.cont [9/16] 0.0, 128
        %681 = vxpose.xlu0.b32.cont [10/16] 0.0, 128
        %682 = vxpose.xlu0.b32.cont [11/16] 0.0, 128
        %683 = vxpose.xlu0.b32.cont [12/16] 0.0, 128
        %684 = vxpose.xlu0.b32.cont [13/16] 0.0, 128
        %685 = vxpose.xlu0.b32.cont [14/16] 0.0, 128
        %686 = vxpose.xlu0.b32.cont [15/16] 0.0, 128
        %687 = vxpose.xlu0.b32.end [16/16] 0.0, 128
        %v688 = vpop.trf.xlu0
        %v689 = vpop.trf.xlu0
        %v690 = vpop.trf.xlu0
        %v691 = vpop.trf.xlu0
        %v692 = vpop.trf.xlu0
        %v693 = vpop.trf.xlu0
        %v694 = vpop.trf.xlu0
        %v695 = vpop.trf.xlu0
        %v696 = vpop.trf.xlu0
        %v697 = vpop.trf.xlu0
        %v698 = vpop.trf.xlu0
        %v699 = vpop.trf.xlu0
        %v700 = vpop.trf.xlu0
        %v701 = vpop.trf.xlu0
        %v702 = vpop.trf.xlu0
        %v703 = vpop.trf.xlu0
        %704 = vxpose.xlu0.b32.start [1/16] %v565, 128
        %705 = vxpose.xlu0.b32.cont [2/16] 0.0, 128
        %706 = vxpose.xlu0.b32.cont [3/16] 0.0, 128
        %707 = vxpose.xlu0.b32.cont [4/16] 0.0, 128
        %708 = vxpose.xlu0.b32.cont [5/16] 0.0, 128
        %709 = vxpose.xlu0.b32.cont [6/16] 0.0, 128
        %710 = vxpose.xlu0.b32.cont [7/16] 0.0, 128
        %711 = vxpose.xlu0.b32.cont [8/16] 0.0, 128
        %712 = vxpose.xlu0.b32.cont [9/16] 0.0, 128
        %713 = vxpose.xlu0.b32.cont [10/16] 0.0, 128
        %714 = vxpose.xlu0.b32.cont [11/16] 0.0, 128
        %715 = vxpose.xlu0.b32.cont [12/16] 0.0, 128
        %716 = vxpose.xlu0.b32.cont [13/16] 0.0, 128
        %717 = vxpose.xlu0.b32.cont [14/16] 0.0, 128
        %718 = vxpose.xlu0.b32.cont [15/16] 0.0, 128
        %719 = vxpose.xlu0.b32.end [16/16] 0.0, 128
        %v720 = vpop.trf.xlu0
        %v721 = vpop.trf.xlu0
        %v722 = vpop.trf.xlu0
        %v723 = vpop.trf.xlu0
        %v724 = vpop.trf.xlu0
        %v725 = vpop.trf.xlu0
        %v726 = vpop.trf.xlu0
        %v727 = vpop.trf.xlu0
        %v728 = vpop.trf.xlu0
        %v729 = vpop.trf.xlu0
        %v730 = vpop.trf.xlu0
        %v731 = vpop.trf.xlu0
        %v732 = vpop.trf.xlu0
        %v733 = vpop.trf.xlu0
        %v734 = vpop.trf.xlu0
        %v735 = vpop.trf.xlu0
        %vm736 = vcmask 64512
        %v738 = vsel %vm736, %v624, 0
        %740 = vmatprep.subr.mxu0 0.0
        %741 = vmatpush1.msra.mxu0 %v570
        %742 = vmatprep.subr.mxu0 0.0
        %743 = vmatpush1.msra.mxu0 0.0
        %744 = vmatprep.subr.mxu0 0.0
        %745 = vmatpush1.msra.mxu0 0.0
        %746 = vmatprep.subr.mxu0 0.0
        %747 = vmatpush1.msra.mxu0 0.0
        %748 = vmatprep.subr.mxu0 0.0
        %749 = vmatpush1.msra.mxu0 0.0
        %750 = vmatprep.subr.mxu0 0.0
        %751 = vmatpush1.msra.mxu0 0.0
        %752 = vmatprep.subr.mxu0 0.0
        %753 = vmatpush1.msra.mxu0 0.0
        %754 = vmatprep.subr.mxu0 0.0
        %755 = vmatpush1.msra.mxu0 0.0
        %756 = vmatprep.subr.mxu0 0.0
        %757 = vmatpush1.msra.mxu0 0.0
        %758 = vmatprep.subr.mxu0 0.0
        %759 = vmatpush1.msra.mxu0 0.0
        %760 = vmatprep.subr.mxu0 0.0
        %761 = vmatpush1.msra.mxu0 0.0
        %762 = vmatprep.subr.mxu0 0.0
        %763 = vmatpush1.msra.mxu0 0.0
        %764 = vmatprep.subr.mxu0 0.0
        %765 = vmatpush1.msra.mxu0 0.0
        %766 = vmatprep.subr.mxu0 0.0
        %767 = vmatpush1.msra.mxu0 0.0
        %768 = vmatprep.subr.mxu0 0.0
        %769 = vmatpush1.msra.mxu0 0.0
        %770 = vmatprep.subr.mxu0 0.0
        %771 = vmatpush1.msra.mxu0 0.0
        %772 = vmatprep.subr.mxu0 0.0
        %773 = vmatpush1.msra.mxu0 0.0
        %774 = vmatprep.subr.mxu0 0.0
        %775 = vmatpush1.msra.mxu0 0.0
        %776 = vmatprep.subr.mxu0 0.0
        %777 = vmatpush1.msra.mxu0 0.0
        %778 = vmatprep.subr.mxu0 0.0
        %779 = vmatpush1.msra.mxu0 0.0
        %780 = vmatprep.subr.mxu0 0.0
        %781 = vmatpush1.msra.mxu0 0.0
        %782 = vmatprep.subr.mxu0 0.0
        %783 = vmatpush1.msra.mxu0 0.0
        %784 = vmatprep.subr.mxu0 0.0
        %785 = vmatpush1.msra.mxu0 0.0
        %786 = vmatprep.subr.mxu0 0.0
        %787 = vmatpush1.msra.mxu0 0.0
        %788 = vmatprep.subr.mxu0 0.0
        %789 = vmatpush1.msra.mxu0 0.0
        %790 = vmatprep.subr.mxu0 0.0
        %791 = vmatpush1.msra.mxu0 0.0
        %792 = vmatprep.subr.mxu0 0.0
        %793 = vmatpush1.msra.mxu0 0.0
        %794 = vmatprep.subr.mxu0 0.0
        %795 = vmatpush1.msra.mxu0 0.0
        %796 = vmatprep.subr.mxu0 0.0
        %797 = vmatpush1.msra.mxu0 0.0
        %798 = vmatprep.subr.mxu0 0.0
        %799 = vmatpush1.msra.mxu0 0.0
        %800 = vmatprep.subr.mxu0 0.0
        %801 = vmatpush1.msra.mxu0 0.0
        %802 = vmatprep.subr.mxu0 0.0
        %803 = vmatpush1.msra.mxu0 0.0
        %804 = vmatprep.mubr.f32.mxu0 0.0
        %805 = vmatmul.mubr.f32.gmra.mrb[0].mxu0 %v738
        %v806 = vpop.f32.mrb[0].mxu0
        %v807 = vadd.f32 0.0, %v806
        %v808 = vpop.f32.mrb[0].mxu0
        %809 = vdwg.mxu0
        %v811 = vsel %vm736, %v656, 0
        %813 = vmatprep.subr.mxu0 0.0
        %814 = vmatpush1.msra.mxu0 %v575
        %815 = vmatprep.subr.mxu0 0.0
        %816 = vmatpush1.msra.mxu0 0.0
        %817 = vmatprep.subr.mxu0 0.0
        %818 = vmatpush1.msra.mxu0 0.0
        %819 = vmatprep.subr.mxu0 0.0
        %820 = vmatpush1.msra.mxu0 0.0
        %821 = vmatprep.subr.mxu0 0.0
        %822 = vmatpush1.msra.mxu0 0.0
        %823 = vmatprep.subr.mxu0 0.0
        %824 = vmatpush1.msra.mxu0 0.0
        %825 = vmatprep.subr.mxu0 0.0
        %826 = vmatpush1.msra.mxu0 0.0
        %827 = vmatprep.subr.mxu0 0.0
        %828 = vmatpush1.msra.mxu0 0.0
        %829 = vmatprep.subr.mxu0 0.0
        %830 = vmatpush1.msra.mxu0 0.0
        %831 = vmatprep.subr.mxu0 0.0
        %832 = vmatpush1.msra.mxu0 0.0
        %833 = vmatprep.subr.mxu0 0.0
        %834 = vmatpush1.msra.mxu0 0.0
        %835 = vmatprep.subr.mxu0 0.0
        %836 = vmatpush1.msra.mxu0 0.0
        %837 = vmatprep.subr.mxu0 0.0
        %838 = vmatpush1.msra.mxu0 0.0
        %839 = vmatprep.subr.mxu0 0.0
        %840 = vmatpush1.msra.mxu0 0.0
        %841 = vmatprep.subr.mxu0 0.0
        %842 = vmatpush1.msra.mxu0 0.0
        %843 = vmatprep.subr.mxu0 0.0
        %844 = vmatpush1.msra.mxu0 0.0
        %845 = vmatprep.subr.mxu0 0.0
        %846 = vmatpush1.msra.mxu0 0.0
        %847 = vmatprep.subr.mxu0 0.0
        %848 = vmatpush1.msra.mxu0 0.0
        %849 = vmatprep.subr.mxu0 0.0
        %850 = vmatpush1.msra.mxu0 0.0
        %851 = vmatprep.subr.mxu0 0.0
        %852 = vmatpush1.msra.mxu0 0.0
        %853 = vmatprep.subr.mxu0 0.0
        %854 = vmatpush1.msra.mxu0 0.0
        %855 = vmatprep.subr.mxu0 0.0
        %856 = vmatpush1.msra.mxu0 0.0
        %857 = vmatprep.subr.mxu0 0.0
        %858 = vmatpush1.msra.mxu0 0.0
        %859 = vmatprep.subr.mxu0 0.0
        %860 = vmatpush1.msra.mxu0 0.0
        %861 = vmatprep.subr.mxu0 0.0
        %862 = vmatpush1.msra.mxu0 0.0
        %863 = vmatprep.subr.mxu0 0.0
        %864 = vmatpush1.msra.mxu0 0.0
        %865 = vmatprep.subr.mxu0 0.0
        %866 = vmatpush1.msra.mxu0 0.0
        %867 = vmatprep.subr.mxu0 0.0
        %868 = vmatpush1.msra.mxu0 0.0
        %869 = vmatprep.subr.mxu0 0.0
        %870 = vmatpush1.msra.mxu0 0.0
        %871 = vmatprep.subr.mxu0 0.0
        %872 = vmatpush1.msra.mxu0 0.0
        %873 = vmatprep.subr.mxu0 0.0
        %874 = vmatpush1.msra.mxu0 0.0
        %875 = vmatprep.subr.mxu0 0.0
        %876 = vmatpush1.msra.mxu0 0.0
        %877 = vmatprep.mubr.f32.mxu0 0.0
        %878 = vmatmul.mubr.f32.gmra.mrb[0].mxu0 %v811
        %v879 = vpop.f32.mrb[0].mxu0
        %v880 = vadd.f32 0.0, %v879
        %v881 = vpop.f32.mrb[0].mxu0
        %882 = vdwg.mxu0
        %v884 = vsel %vm736, %v688, 0
        %886 = vmatprep.subr.mxu0 0.0
        %887 = vmatpush1.msra.mxu0 %v580
        %888 = vmatprep.subr.mxu0 0.0
        %889 = vmatpush1.msra.mxu0 0.0
        %890 = vmatprep.subr.mxu0 0.0
        %891 = vmatpush1.msra.mxu0 0.0
        %892 = vmatprep.subr.mxu0 0.0
        %893 = vmatpush1.msra.mxu0 0.0
        %894 = vmatprep.subr.mxu0 0.0
        %895 = vmatpush1.msra.mxu0 0.0
        %896 = vmatprep.subr.mxu0 0.0
        %897 = vmatpush1.msra.mxu0 0.0
        %898 = vmatprep.subr.mxu0 0.0
        %899 = vmatpush1.msra.mxu0 0.0
        %900 = vmatprep.subr.mxu0 0.0
        %901 = vmatpush1.msra.mxu0 0.0
        %902 = vmatprep.subr.mxu0 0.0
        %903 = vmatpush1.msra.mxu0 0.0
        %904 = vmatprep.subr.mxu0 0.0
        %905 = vmatpush1.msra.mxu0 0.0
        %906 = vmatprep.subr.mxu0 0.0
        %907 = vmatpush1.msra.mxu0 0.0
        %908 = vmatprep.subr.mxu0 0.0
        %909 = vmatpush1.msra.mxu0 0.0
        %910 = vmatprep.subr.mxu0 0.0
        %911 = vmatpush1.msra.mxu0 0.0
        %912 = vmatprep.subr.mxu0 0.0
        %913 = vmatpush1.msra.mxu0 0.0
        %914 = vmatprep.subr.mxu0 0.0
        %915 = vmatpush1.msra.mxu0 0.0
        %916 = vmatprep.subr.mxu0 0.0
        %917 = vmatpush1.msra.mxu0 0.0
        %918 = vmatprep.subr.mxu0 0.0
        %919 = vmatpush1.msra.mxu0 0.0
        %920 = vmatprep.subr.mxu0 0.0
        %921 = vmatpush1.msra.mxu0 0.0
        %922 = vmatprep.subr.mxu0 0.0
        %923 = vmatpush1.msra.mxu0 0.0
        %924 = vmatprep.subr.mxu0 0.0
        %925 = vmatpush1.msra.mxu0 0.0
        %926 = vmatprep.subr.mxu0 0.0
        %927 = vmatpush1.msra.mxu0 0.0
        %928 = vmatprep.subr.mxu0 0.0
        %929 = vmatpush1.msra.mxu0 0.0
        %930 = vmatprep.subr.mxu0 0.0
        %931 = vmatpush1.msra.mxu0 0.0
        %932 = vmatprep.subr.mxu0 0.0
        %933 = vmatpush1.msra.mxu0 0.0
        %934 = vmatprep.subr.mxu0 0.0
        %935 = vmatpush1.msra.mxu0 0.0
        %936 = vmatprep.subr.mxu0 0.0
        %937 = vmatpush1.msra.mxu0 0.0
        %938 = vmatprep.subr.mxu0 0.0
        %939 = vmatpush1.msra.mxu0 0.0
        %940 = vmatprep.subr.mxu0 0.0
        %941 = vmatpush1.msra.mxu0 0.0
        %942 = vmatprep.subr.mxu0 0.0
        %943 = vmatpush1.msra.mxu0 0.0
        %944 = vmatprep.subr.mxu0 0.0
        %945 = vmatpush1.msra.mxu0 0.0
        %946 = vmatprep.subr.mxu0 0.0
        %947 = vmatpush1.msra.mxu0 0.0
        %948 = vmatprep.subr.mxu0 0.0
        %949 = vmatpush1.msra.mxu0 0.0
        %950 = vmatprep.mubr.f32.mxu0 0.0
        %951 = vmatmul.mubr.f32.gmra.mrb[0].mxu0 %v884
        %v952 = vpop.f32.mrb[0].mxu0
        %v953 = vadd.f32 0.0, %v952
        %v954 = vpop.f32.mrb[0].mxu0
        %955 = vdwg.mxu0
        %v957 = vsel %vm736, %v720, 0
        %959 = vmatprep.subr.mxu0 0.0
        %960 = vmatpush1.msra.mxu0 %v585
        %961 = vmatprep.subr.mxu0 0.0
        %962 = vmatpush1.msra.mxu0 0.0
        %963 = vmatprep.subr.mxu0 0.0
        %964 = vmatpush1.msra.mxu0 0.0
        %965 = vmatprep.subr.mxu0 0.0
        %966 = vmatpush1.msra.mxu0 0.0
        %967 = vmatprep.subr.mxu0 0.0
        %968 = vmatpush1.msra.mxu0 0.0
        %969 = vmatprep.subr.mxu0 0.0
        %970 = vmatpush1.msra.mxu0 0.0
        %971 = vmatprep.subr.mxu0 0.0
        %972 = vmatpush1.msra.mxu0 0.0
        %973 = vmatprep.subr.mxu0 0.0
        %974 = vmatpush1.msra.mxu0 0.0
        %975 = vmatprep.subr.mxu0 0.0
        %976 = vmatpush1.msra.mxu0 0.0
        %977 = vmatprep.subr.mxu0 0.0
        %978 = vmatpush1.msra.mxu0 0.0
        %979 = vmatprep.subr.mxu0 0.0
        %980 = vmatpush1.msra.mxu0 0.0
        %981 = vmatprep.subr.mxu0 0.0
        %982 = vmatpush1.msra.mxu0 0.0
        %983 = vmatprep.subr.mxu0 0.0
        %984 = vmatpush1.msra.mxu0 0.0
        %985 = vmatprep.subr.mxu0 0.0
        %986 = vmatpush1.msra.mxu0 0.0
        %987 = vmatprep.subr.mxu0 0.0
        %988 = vmatpush1.msra.mxu0 0.0
        %989 = vmatprep.subr.mxu0 0.0
        %990 = vmatpush1.msra.mxu0 0.0
        %991 = vmatprep.subr.mxu0 0.0
        %992 = vmatpush1.msra.mxu0 0.0
        %993 = vmatprep.subr.mxu0 0.0
        %994 = vmatpush1.msra.mxu0 0.0
        %995 = vmatprep.subr.mxu0 0.0
        %996 = vmatpush1.msra.mxu0 0.0
        %997 = vmatprep.subr.mxu0 0.0
        %998 = vmatpush1.msra.mxu0 0.0
        %999 = vmatprep.subr.mxu0 0.0
        %1000 = vmatpush1.msra.mxu0 0.0
        %1001 = vmatprep.subr.mxu0 0.0
        %1002 = vmatpush1.msra.mxu0 0.0
        %1003 = vmatprep.subr.mxu0 0.0
        %1004 = vmatpush1.msra.mxu0 0.0
        %1005 = vmatprep.subr.mxu0 0.0
        %1006 = vmatpush1.msra.mxu0 0.0
        %1007 = vmatprep.subr.mxu0 0.0
        %1008 = vmatpush1.msra.mxu0 0.0
        %1009 = vmatprep.subr.mxu0 0.0
        %1010 = vmatpush1.msra.mxu0 0.0
        %1011 = vmatprep.subr.mxu0 0.0
        %1012 = vmatpush1.msra.mxu0 0.0
        %1013 = vmatprep.subr.mxu0 0.0
        %1014 = vmatpush1.msra.mxu0 0.0
        %1015 = vmatprep.subr.mxu0 0.0
        %1016 = vmatpush1.msra.mxu0 0.0
        %1017 = vmatprep.subr.mxu0 0.0
        %1018 = vmatpush1.msra.mxu0 0.0
        %1019 = vmatprep.subr.mxu0 0.0
        %1020 = vmatpush1.msra.mxu0 0.0
        %1021 = vmatprep.subr.mxu0 0.0
        %1022 = vmatpush1.msra.mxu0 0.0
        %1023 = vmatprep.mubr.f32.mxu0 0.0
        %1024 = vmatmul.mubr.f32.gmra.mrb[0].mxu0 %v957
        %v1025 = vpop.f32.mrb[0].mxu0
        %v1026 = vadd.f32 0.0, %v1025
        %v1027 = vpop.f32.mrb[0].mxu0
        %1028 = vdwg.mxu0
        %v1029 = vsel %vm736, %v807, -inf
        %1030 = vmax.xlane.f32.xlu0 %v1029
        %v1031 = vpop.xlane.xlu0 %1030
        %v1032 = vsel %vm736, %v880, -inf
        %1033 = vmax.xlane.f32.xlu0 %v1032
        %v1034 = vpop.xlane.xlu0 %1033
        %v1035 = vsel %vm736, %v953, -inf
        %1036 = vmax.xlane.f32.xlu0 %v1035
        %v1037 = vpop.xlane.xlu0 %1036
        %v1038 = vsel %vm736, %v1026, -inf
        %1039 = vmax.xlane.f32.xlu0 %v1038
        %v1040 = vpop.xlane.xlu0 %1039
        %v1041 = vsub.f32 %v807, %v1031
        %v1042 = vsub.f32 %v880, %v1034
        %v1043 = vsub.f32 %v953, %v1037
        %v1044 = vsub.f32 %v1026, %v1040
        %v1045 = vmul.f32 %v1041, 1.442695
        %v1046 = vpow.pop %v1045
        %v1047 = vmul.f32 %v1042, 1.442695
        %v1048 = vpow.pop %v1047
        %v1049 = vmul.f32 %v1043, 1.442695
        %v1050 = vpow.pop %v1049
        %v1051 = vmul.f32 %v1044, 1.442695
        %v1052 = vpow.pop %v1051
        %v1053 = vsel %vm736, %v1046, 0.0
        %1054 = vadd.xlane.f32.xlu0 %v1053
        %v1055 = vpop.xlane.xlu0 %1054
        %v1056 = vsel %vm736, %v1048, 0.0
        %1057 = vadd.xlane.f32.xlu0 %v1056
        %v1058 = vpop.xlane.xlu0 %1057
        %v1059 = vsel %vm736, %v1050, 0.0
        %1060 = vadd.xlane.f32.xlu0 %v1059
        %v1061 = vpop.xlane.xlu0 %1060
        %v1062 = vsel %vm736, %v1052, 0.0
        %1063 = vadd.xlane.f32.xlu0 %v1062
        %v1064 = vpop.xlane.xlu0 %1063
        %v1065 = vrcp.pop %v1055
        %v1066 = vmul.f32 %v1046, %v1065
        %v1067 = vrcp.pop %v1058
        %v1068 = vmul.f32 %v1048, %v1067
        %v1069 = vrcp.pop %v1061
        %v1070 = vmul.f32 %v1050, %v1069
        %v1071 = vrcp.pop %v1064
        %v1072 = vmul.f32 %v1052, %v1071
        %v1074 = vsel %vm736, %v590, 0
        %v1077 = vsel %vm736, %v1066, 0
        %1079 = vmatprep.subr.mxu0 0.0
        %1080 = vmatpush1.xpose.msra.mxu0 %v1077
        %1081 = vmatprep.subr.mxu0 0.0
        %1082 = vmatpush1.xpose.msra.mxu0 0.0
        %1083 = vmatprep.subr.mxu0 0.0
        %1084 = vmatpush1.xpose.msra.mxu0 0.0
        %1085 = vmatprep.subr.mxu0 0.0
        %1086 = vmatpush1.xpose.msra.mxu0 0.0
        %1087 = vmatprep.subr.mxu0 0.0
        %1088 = vmatpush1.xpose.msra.mxu0 0.0
        %1089 = vmatprep.subr.mxu0 0.0
        %1090 = vmatpush1.xpose.msra.mxu0 0.0
        %1091 = vmatprep.subr.mxu0 0.0
        %1092 = vmatpush1.xpose.msra.mxu0 0.0
        %1093 = vmatprep.subr.mxu0 0.0
        %1094 = vmatpush1.xpose.msra.mxu0 0.0
        %1095 = vmatprep.subr.mxu0 0.0
        %1096 = vmatpush1.xpose.msra.mxu0 0.0
        %1097 = vmatprep.subr.mxu0 0.0
        %1098 = vmatpush1.xpose.msra.mxu0 0.0
        %1099 = vmatprep.subr.mxu0 0.0
        %1100 = vmatpush1.xpose.msra.mxu0 0.0
        %1101 = vmatprep.subr.mxu0 0.0
        %1102 = vmatpush1.xpose.msra.mxu0 0.0
        %1103 = vmatprep.subr.mxu0 0.0
        %1104 = vmatpush1.xpose.msra.mxu0 0.0
        %1105 = vmatprep.subr.mxu0 0.0
        %1106 = vmatpush1.xpose.msra.mxu0 0.0
        %1107 = vmatprep.subr.mxu0 0.0
        %1108 = vmatpush1.xpose.msra.mxu0 0.0
        %1109 = vmatprep.subr.mxu0 0.0
        %1110 = vmatpush1.xpose.msra.mxu0 0.0
        %1111 = vmatprep.subr.mxu0 0.0
        %1112 = vmatpush1.xpose.msra.mxu0 0.0
        %1113 = vmatprep.subr.mxu0 0.0
        %1114 = vmatpush1.xpose.msra.mxu0 0.0
        %1115 = vmatprep.subr.mxu0 0.0
        %1116 = vmatpush1.xpose.msra.mxu0 0.0
        %1117 = vmatprep.subr.mxu0 0.0
        %1118 = vmatpush1.xpose.msra.mxu0 0.0
        %1119 = vmatprep.subr.mxu0 0.0
        %1120 = vmatpush1.xpose.msra.mxu0 0.0
        %1121 = vmatprep.subr.mxu0 0.0
        %1122 = vmatpush1.xpose.msra.mxu0 0.0
        %1123 = vmatprep.subr.mxu0 0.0
        %1124 = vmatpush1.xpose.msra.mxu0 0.0
        %1125 = vmatprep.subr.mxu0 0.0
        %1126 = vmatpush1.xpose.msra.mxu0 0.0
        %1127 = vmatprep.subr.mxu0 0.0
        %1128 = vmatpush1.xpose.msra.mxu0 0.0
        %1129 = vmatprep.subr.mxu0 0.0
        %1130 = vmatpush1.xpose.msra.mxu0 0.0
        %1131 = vmatprep.subr.mxu0 0.0
        %1132 = vmatpush1.xpose.msra.mxu0 0.0
        %1133 = vmatprep.subr.mxu0 0.0
        %1134 = vmatpush1.xpose.msra.mxu0 0.0
        %1135 = vmatprep.subr.mxu0 0.0
        %1136 = vmatpush1.xpose.msra.mxu0 0.0
        %1137 = vmatprep.subr.mxu0 0.0
        %1138 = vmatpush1.xpose.msra.mxu0 0.0
        %1139 = vmatprep.subr.mxu0 0.0
        %1140 = vmatpush1.xpose.msra.mxu0 0.0
        %1141 = vmatprep.subr.mxu0 0.0
        %1142 = vmatpush1.xpose.msra.mxu0 0.0
        %1143 = vmatprep.mubr.f32.mxu0 0.0
        %1144 = vmatmul.mubr.f32.gmra.mrb[0].mxu0 %v1074
        %v1145 = vpop.f32.mrb[0].mxu0
        %v1146 = vadd.f32 0.0, %v1145
        %v1147 = vpop.f32.mrb[0].mxu0
        %1148 = vdwg.mxu0
        %v1150 = vsel %vm736, %v595, 0
        %v1153 = vsel %vm736, %v1068, 0
        %1155 = vmatprep.subr.mxu0 0.0
        %1156 = vmatpush1.xpose.msra.mxu0 %v1153
        %1157 = vmatprep.subr.mxu0 0.0
        %1158 = vmatpush1.xpose.msra.mxu0 0.0
        %1159 = vmatprep.subr.mxu0 0.0
        %1160 = vmatpush1.xpose.msra.mxu0 0.0
        %1161 = vmatprep.subr.mxu0 0.0
        %1162 = vmatpush1.xpose.msra.mxu0 0.0
        %1163 = vmatprep.subr.mxu0 0.0
        %1164 = vmatpush1.xpose.msra.mxu0 0.0
        %1165 = vmatprep.subr.mxu0 0.0
        %1166 = vmatpush1.xpose.msra.mxu0 0.0
        %1167 = vmatprep.subr.mxu0 0.0
        %1168 = vmatpush1.xpose.msra.mxu0 0.0
        %1169 = vmatprep.subr.mxu0 0.0
        %1170 = vmatpush1.xpose.msra.mxu0 0.0
        %1171 = vmatprep.subr.mxu0 0.0
        %1172 = vmatpush1.xpose.msra.mxu0 0.0
        %1173 = vmatprep.subr.mxu0 0.0
        %1174 = vmatpush1.xpose.msra.mxu0 0.0
        %1175 = vmatprep.subr.mxu0 0.0
        %1176 = vmatpush1.xpose.msra.mxu0 0.0
        %1177 = vmatprep.subr.mxu0 0.0
        %1178 = vmatpush1.xpose.msra.mxu0 0.0
        %1179 = vmatprep.subr.mxu0 0.0
        %1180 = vmatpush1.xpose.msra.mxu0 0.0
        %1181 = vmatprep.subr.mxu0 0.0
        %1182 = vmatpush1.xpose.msra.mxu0 0.0
        %1183 = vmatprep.subr.mxu0 0.0
        %1184 = vmatpush1.xpose.msra.mxu0 0.0
        %1185 = vmatprep.subr.mxu0 0.0
        %1186 = vmatpush1.xpose.msra.mxu0 0.0
        %1187 = vmatprep.subr.mxu0 0.0
        %1188 = vmatpush1.xpose.msra.mxu0 0.0
        %1189 = vmatprep.subr.mxu0 0.0
        %1190 = vmatpush1.xpose.msra.mxu0 0.0
        %1191 = vmatprep.subr.mxu0 0.0
        %1192 = vmatpush1.xpose.msra.mxu0 0.0
        %1193 = vmatprep.subr.mxu0 0.0
        %1194 = vmatpush1.xpose.msra.mxu0 0.0
        %1195 = vmatprep.subr.mxu0 0.0
        %1196 = vmatpush1.xpose.msra.mxu0 0.0
        %1197 = vmatprep.subr.mxu0 0.0
        %1198 = vmatpush1.xpose.msra.mxu0 0.0
        %1199 = vmatprep.subr.mxu0 0.0
        %1200 = vmatpush1.xpose.msra.mxu0 0.0
        %1201 = vmatprep.subr.mxu0 0.0
        %1202 = vmatpush1.xpose.msra.mxu0 0.0
        %1203 = vmatprep.subr.mxu0 0.0
        %1204 = vmatpush1.xpose.msra.mxu0 0.0
        %1205 = vmatprep.subr.mxu0 0.0
        %1206 = vmatpush1.xpose.msra.mxu0 0.0
        %1207 = vmatprep.subr.mxu0 0.0
        %1208 = vmatpush1.xpose.msra.mxu0 0.0
        %1209 = vmatprep.subr.mxu0 0.0
        %1210 = vmatpush1.xpose.msra.mxu0 0.0
        %1211 = vmatprep.subr.mxu0 0.0
        %1212 = vmatpush1.xpose.msra.mxu0 0.0
        %1213 = vmatprep.subr.mxu0 0.0
        %1214 = vmatpush1.xpose.msra.mxu0 0.0
        %1215 = vmatprep.subr.mxu0 0.0
        %1216 = vmatpush1.xpose.msra.mxu0 0.0
        %1217 = vmatprep.subr.mxu0 0.0
        %1218 = vmatpush1.xpose.msra.mxu0 0.0
        %1219 = vmatprep.mubr.f32.mxu0 0.0
        %1220 = vmatmul.mubr.f32.gmra.mrb[0].mxu0 %v1150
        %v1221 = vpop.f32.mrb[0].mxu0
        %v1222 = vadd.f32 0.0, %v1221
        %v1223 = vpop.f32.mrb[0].mxu0
        %1224 = vdwg.mxu0
        %v1226 = vsel %vm736, %v600, 0
        %v1229 = vsel %vm736, %v1070, 0
        %1231 = vmatprep.subr.mxu0 0.0
        %1232 = vmatpush1.xpose.msra.mxu0 %v1229
        %1233 = vmatprep.subr.mxu0 0.0
        %1234 = vmatpush1.xpose.msra.mxu0 0.0
        %1235 = vmatprep.subr.mxu0 0.0
        %1236 = vmatpush1.xpose.msra.mxu0 0.0
        %1237 = vmatprep.subr.mxu0 0.0
        %1238 = vmatpush1.xpose.msra.mxu0 0.0
        %1239 = vmatprep.subr.mxu0 0.0
        %1240 = vmatpush1.xpose.msra.mxu0 0.0
        %1241 = vmatprep.subr.mxu0 0.0
        %1242 = vmatpush1.xpose.msra.mxu0 0.0
        %1243 = vmatprep.subr.mxu0 0.0
        %1244 = vmatpush1.xpose.msra.mxu0 0.0
        %1245 = vmatprep.subr.mxu0 0.0
        %1246 = vmatpush1.xpose.msra.mxu0 0.0
        %1247 = vmatprep.subr.mxu0 0.0
        %1248 = vmatpush1.xpose.msra.mxu0 0.0
        %1249 = vmatprep.subr.mxu0 0.0
        %1250 = vmatpush1.xpose.msra.mxu0 0.0
        %1251 = vmatprep.subr.mxu0 0.0
        %1252 = vmatpush1.xpose.msra.mxu0 0.0
        %1253 = vmatprep.subr.mxu0 0.0
        %1254 = vmatpush1.xpose.msra.mxu0 0.0
        %1255 = vmatprep.subr.mxu0 0.0
        %1256 = vmatpush1.xpose.msra.mxu0 0.0
        %1257 = vmatprep.subr.mxu0 0.0
        %1258 = vmatpush1.xpose.msra.mxu0 0.0
        %1259 = vmatprep.subr.mxu0 0.0
        %1260 = vmatpush1.xpose.msra.mxu0 0.0
        %1261 = vmatprep.subr.mxu0 0.0
        %1262 = vmatpush1.xpose.msra.mxu0 0.0
        %1263 = vmatprep.subr.mxu0 0.0
        %1264 = vmatpush1.xpose.msra.mxu0 0.0
        %1265 = vmatprep.subr.mxu0 0.0
        %1266 = vmatpush1.xpose.msra.mxu0 0.0
        %1267 = vmatprep.subr.mxu0 0.0
        %1268 = vmatpush1.xpose.msra.mxu0 0.0
        %1269 = vmatprep.subr.mxu0 0.0
        %1270 = vmatpush1.xpose.msra.mxu0 0.0
        %1271 = vmatprep.subr.mxu0 0.0
        %1272 = vmatpush1.xpose.msra.mxu0 0.0
        %1273 = vmatprep.subr.mxu0 0.0
        %1274 = vmatpush1.xpose.msra.mxu0 0.0
        %1275 = vmatprep.subr.mxu0 0.0
        %1276 = vmatpush1.xpose.msra.mxu0 0.0
        %1277 = vmatprep.subr.mxu0 0.0
        %1278 = vmatpush1.xpose.msra.mxu0 0.0
        %1279 = vmatprep.subr.mxu0 0.0
        %1280 = vmatpush1.xpose.msra.mxu0 0.0
        %1281 = vmatprep.subr.mxu0 0.0
        %1282 = vmatpush1.xpose.msra.mxu0 0.0
        %1283 = vmatprep.subr.mxu0 0.0
        %1284 = vmatpush1.xpose.msra.mxu0 0.0
        %1285 = vmatprep.subr.mxu0 0.0
        %1286 = vmatpush1.xpose.msra.mxu0 0.0
        %1287 = vmatprep.subr.mxu0 0.0
        %1288 = vmatpush1.xpose.msra.mxu0 0.0
        %1289 = vmatprep.subr.mxu0 0.0
        %1290 = vmatpush1.xpose.msra.mxu0 0.0
        %1291 = vmatprep.subr.mxu0 0.0
        %1292 = vmatpush1.xpose.msra.mxu0 0.0
        %1293 = vmatprep.subr.mxu0 0.0
        %1294 = vmatpush1.xpose.msra.mxu0 0.0
        %1295 = vmatprep.mubr.f32.mxu0 0.0
        %1296 = vmatmul.mubr.f32.gmra.mrb[0].mxu0 %v1226
        %v1297 = vpop.f32.mrb[0].mxu0
        %v1298 = vadd.f32 0.0, %v1297
        %v1299 = vpop.f32.mrb[0].mxu0
        %1300 = vdwg.mxu0
        %v1302 = vsel %vm736, %v605, 0
        %v1305 = vsel %vm736, %v1072, 0
        %1307 = vmatprep.subr.mxu0 0.0
        %1308 = vmatpush1.xpose.msra.mxu0 %v1305
        %1309 = vmatprep.subr.mxu0 0.0
        %1310 = vmatpush1.xpose.msra.mxu0 0.0
        %1311 = vmatprep.subr.mxu0 0.0
        %1312 = vmatpush1.xpose.msra.mxu0 0.0
        %1313 = vmatprep.subr.mxu0 0.0
        %1314 = vmatpush1.xpose.msra.mxu0 0.0
        %1315 = vmatprep.subr.mxu0 0.0
        %1316 = vmatpush1.xpose.msra.mxu0 0.0
        %1317 = vmatprep.subr.mxu0 0.0
        %1318 = vmatpush1.xpose.msra.mxu0 0.0
        %1319 = vmatprep.subr.mxu0 0.0
        %1320 = vmatpush1.xpose.msra.mxu0 0.0
        %1321 = vmatprep.subr.mxu0 0.0
        %1322 = vmatpush1.xpose.msra.mxu0 0.0
        %1323 = vmatprep.subr.mxu0 0.0
        %1324 = vmatpush1.xpose.msra.mxu0 0.0
        %1325 = vmatprep.subr.mxu0 0.0
        %1326 = vmatpush1.xpose.msra.mxu0 0.0
        %1327 = vmatprep.subr.mxu0 0.0
        %1328 = vmatpush1.xpose.msra.mxu0 0.0
        %1329 = vmatprep.subr.mxu0 0.0
        %1330 = vmatpush1.xpose.msra.mxu0 0.0
        %1331 = vmatprep.subr.mxu0 0.0
        %1332 = vmatpush1.xpose.msra.mxu0 0.0
        %1333 = vmatprep.subr.mxu0 0.0
        %1334 = vmatpush1.xpose.msra.mxu0 0.0
        %1335 = vmatprep.subr.mxu0 0.0
        %1336 = vmatpush1.xpose.msra.mxu0 0.0
        %1337 = vmatprep.subr.mxu0 0.0
        %1338 = vmatpush1.xpose.msra.mxu0 0.0
        %1339 = vmatprep.subr.mxu0 0.0
        %1340 = vmatpush1.xpose.msra.mxu0 0.0
        %1341 = vmatprep.subr.mxu0 0.0
        %1342 = vmatpush1.xpose.msra.mxu0 0.0
        %1343 = vmatprep.subr.mxu0 0.0
        %1344 = vmatpush1.xpose.msra.mxu0 0.0
        %1345 = vmatprep.subr.mxu0 0.0
        %1346 = vmatpush1.xpose.msra.mxu0 0.0
        %1347 = vmatprep.subr.mxu0 0.0
        %1348 = vmatpush1.xpose.msra.mxu0 0.0
        %1349 = vmatprep.subr.mxu0 0.0
        %1350 = vmatpush1.xpose.msra.mxu0 0.0
        %1351 = vmatprep.subr.mxu0 0.0
        %1352 = vmatpush1.xpose.msra.mxu0 0.0
        %1353 = vmatprep.subr.mxu0 0.0
        %1354 = vmatpush1.xpose.msra.mxu0 0.0
        %1355 = vmatprep.subr.mxu0 0.0
        %1356 = vmatpush1.xpose.msra.mxu0 0.0
        %1357 = vmatprep.subr.mxu0 0.0
        %1358 = vmatpush1.xpose.msra.mxu0 0.0
        %1359 = vmatprep.subr.mxu0 0.0
        %1360 = vmatpush1.xpose.msra.mxu0 0.0
        %1361 = vmatprep.subr.mxu0 0.0
        %1362 = vmatpush1.xpose.msra.mxu0 0.0
        %1363 = vmatprep.subr.mxu0 0.0
        %1364 = vmatpush1.xpose.msra.mxu0 0.0
        %1365 = vmatprep.subr.mxu0 0.0
        %1366 = vmatpush1.xpose.msra.mxu0 0.0
        %1367 = vmatprep.subr.mxu0 0.0
        %1368 = vmatpush1.xpose.msra.mxu0 0.0
        %1369 = vmatprep.subr.mxu0 0.0
        %1370 = vmatpush1.xpose.msra.mxu0 0.0
        %1371 = vmatprep.mubr.f32.mxu0 0.0
        %1372 = vmatmul.mubr.f32.gmra.mrb[0].mxu0 %v1302
        %v1373 = vpop.f32.mrb[0].mxu0
        %v1374 = vadd.f32 0.0, %v1373
        %v1375 = vpop.f32.mrb[0].mxu0
        %1376 = vdwg.mxu0
        %v1377 = vld [vmem:[%s386] sm:$0xff]
        %v1378 = vld [vmem:[%s386 + $0x8] sm:$0xff]
        %v1379 = vld [vmem:[%s386 + $0x10] sm:$0xff]
        %v1380 = vld [vmem:[%s386 + $0x18] sm:$0xff]
        %v1382 = vsel %vm407, %v1377, 0
        %v1385 = vsel %vm407, %v1378, 0
        %v1388 = vsel %vm407, %v1379, 0
        %v1391 = vsel %vm407, %v1380, 0
        %1393 = vmatprep.subr.mxu0 0.0
        %1394 = vmatpush1.msra.mxu0 %v1146
        %1395 = vmatprep.subr.mxu0 0.0
        %1396 = vmatpush1.msra.mxu0 %v1222
        %1397 = vmatprep.subr.mxu0 0.0
        %1398 = vmatpush1.msra.mxu0 %v1298
        %1399 = vmatprep.subr.mxu0 0.0
        %1400 = vmatpush1.msra.mxu0 %v1374
        %1401 = vmatprep.subr.mxu0 0.0
        %1402 = vmatpush1.msra.mxu0 0.0
        %1403 = vmatprep.subr.mxu0 0.0
        %1404 = vmatpush1.msra.mxu0 0.0
        %1405 = vmatprep.subr.mxu0 0.0
        %1406 = vmatpush1.msra.mxu0 0.0
        %1407 = vmatprep.subr.mxu0 0.0
        %1408 = vmatpush1.msra.mxu0 0.0
        %1409 = vmatprep.subr.mxu0 0.0
        %1410 = vmatpush1.msra.mxu0 0.0
        %1411 = vmatprep.subr.mxu0 0.0
        %1412 = vmatpush1.msra.mxu0 0.0
        %1413 = vmatprep.subr.mxu0 0.0
        %1414 = vmatpush1.msra.mxu0 0.0
        %1415 = vmatprep.subr.mxu0 0.0
        %1416 = vmatpush1.msra.mxu0 0.0
        %1417 = vmatprep.subr.mxu0 0.0
        %1418 = vmatpush1.msra.mxu0 0.0
        %1419 = vmatprep.subr.mxu0 0.0
        %1420 = vmatpush1.msra.mxu0 0.0
        %1421 = vmatprep.subr.mxu0 0.0
        %1422 = vmatpush1.msra.mxu0 0.0
        %1423 = vmatprep.subr.mxu0 0.0
        %1424 = vmatpush1.msra.mxu0 0.0
        %1425 = vmatprep.subr.mxu0 0.0
        %1426 = vmatpush1.msra.mxu0 0.0
        %1427 = vmatprep.subr.mxu0 0.0
        %1428 = vmatpush1.msra.mxu0 0.0
        %1429 = vmatprep.subr.mxu0 0.0
        %1430 = vmatpush1.msra.mxu0 0.0
        %1431 = vmatprep.subr.mxu0 0.0
        %1432 = vmatpush1.msra.mxu0 0.0
        %1433 = vmatprep.subr.mxu0 0.0
        %1434 = vmatpush1.msra.mxu0 0.0
        %1435 = vmatprep.subr.mxu0 0.0
        %1436 = vmatpush1.msra.mxu0 0.0
        %1437 = vmatprep.subr.mxu0 0.0
        %1438 = vmatpush1.msra.mxu0 0.0
        %1439 = vmatprep.subr.mxu0 0.0
        %1440 = vmatpush1.msra.mxu0 0.0
        %1441 = vmatprep.subr.mxu0 0.0
        %1442 = vmatpush1.msra.mxu0 0.0
        %1443 = vmatprep.subr.mxu0 0.0
        %1444 = vmatpush1.msra.mxu0 0.0
        %1445 = vmatprep.subr.mxu0 0.0
        %1446 = vmatpush1.msra.mxu0 0.0
        %1447 = vmatprep.subr.mxu0 0.0
        %1448 = vmatpush1.msra.mxu0 0.0
        %1449 = vmatprep.subr.mxu0 0.0
        %1450 = vmatpush1.msra.mxu0 0.0
        %1451 = vmatprep.subr.mxu0 0.0
        %1452 = vmatpush1.msra.mxu0 0.0
        %1453 = vmatprep.subr.mxu0 0.0
        %1454 = vmatpush1.msra.mxu0 0.0
        %1455 = vmatprep.subr.mxu0 0.0
        %1456 = vmatpush1.msra.mxu0 0.0
        %1457 = vmatprep.mubr.f32.mxu0 0.0
        %1458 = vmatmul.mubr.f32.gmra.mrb[0].mxu0 %v1382
        %v1459 = vpop.f32.mrb[0].mxu0
        %v1460 = vadd.f32 0.0, %v1459
        %v1461 = vpop.f32.mrb[0].mxu0
        %1462 = vmatprep.mubr.f32.mxu0 0.0
        %1463 = vmatmul.mubr.f32.gmra.mrb[0].mxu0 %v1385
        %v1464 = vpop.f32.mrb[0].mxu0
        %v1465 = vadd.f32 0.0, %v1464
        %v1466 = vpop.f32.mrb[0].mxu0
        %1467 = vmatprep.mubr.f32.mxu0 0.0
        %1468 = vmatmul.mubr.f32.gmra.mrb[0].mxu0 %v1388
        %v1469 = vpop.f32.mrb[0].mxu0
        %v1470 = vadd.f32 0.0, %v1469
        %v1471 = vpop.f32.mrb[0].mxu0
        %1472 = vmatprep.mubr.f32.mxu0 0.0
        %1473 = vmatmul.mubr.f32.gmra.mrb[0].mxu0 %v1391
        %v1474 = vpop.f32.mrb[0].mxu0
        %v1475 = vadd.f32 0.0, %v1474
        %v1476 = vpop.f32.mrb[0].mxu0
        %1477 = vdwg.mxu0
        %1478 = vxpose.xlu0.b32.start [1/16] %v1460, 128
        %1479 = vxpose.xlu0.b32.cont [2/16] %v1465, 128
        %1480 = vxpose.xlu0.b32.cont [3/16] %v1470, 128
        %1481 = vxpose.xlu0.b32.cont [4/16] %v1475, 128
        %1482 = vxpose.xlu0.b32.cont [5/16] 0.0, 128
        %1483 = vxpose.xlu0.b32.cont [6/16] 0.0, 128
        %1484 = vxpose.xlu0.b32.cont [7/16] 0.0, 128
        %1485 = vxpose.xlu0.b32.cont [8/16] 0.0, 128
        %1486 = vxpose.xlu0.b32.cont [9/16] 0.0, 128
        %1487 = vxpose.xlu0.b32.cont [10/16] 0.0, 128
        %1488 = vxpose.xlu0.b32.cont [11/16] 0.0, 128
        %1489 = vxpose.xlu0.b32.cont [12/16] 0.0, 128
        %1490 = vxpose.xlu0.b32.cont [13/16] 0.0, 128
        %1491 = vxpose.xlu0.b32.cont [14/16] 0.0, 128
        %1492 = vxpose.xlu0.b32.cont [15/16] 0.0, 128
        %1493 = vxpose.xlu0.b32.end [16/16] 0.0, 128
        %v1494 = vpop.trf.xlu0
        %v1495 = vpop.trf.xlu0
        %v1496 = vpop.trf.xlu0
        %v1497 = vpop.trf.xlu0
        %v1498 = vpop.trf.xlu0
        %v1499 = vpop.trf.xlu0
        %v1500 = vpop.trf.xlu0
        %v1501 = vpop.trf.xlu0
        %v1502 = vpop.trf.xlu0
        %v1503 = vpop.trf.xlu0
        %v1504 = vpop.trf.xlu0
        %v1505 = vpop.trf.xlu0
        %v1506 = vpop.trf.xlu0
        %v1507 = vpop.trf.xlu0
        %v1508 = vpop.trf.xlu0
        %v1509 = vpop.trf.xlu0
        %v1510 = vadd.f32 %v404, %v1494
        %v1511 = vlaneseq
        %v1512 = vshrl.u32 %v1511, 7
        %v1513 = vsub.s32 2, %v1512
        %v1514 = vrot.slane %v405, %v1513
        %v1515 = vadd.f32 %v1510, %v1514
        %v1516 = vsel %vm407, %v1515, 0.0
        %1517 = vadd.xlane.f32.xlu0 %v1516
        %v1518 = vpop.xlane.xlu0 %1517
        %v1519 = vmul.f32 %v1518, %v411
        %v1520 = vsub.f32 %v1515, %v1519
        %v1521 = vmul.f32 %v1520, %v1520
        %v1522 = vsel %vm407, %v1521, 0.0
        %1523 = vadd.xlane.f32.xlu0 %v1522
        %v1524 = vpop.xlane.xlu0 %1523
        %v1525 = vmul.f32 %v1524, %v411
        %v1526 = vadd.f32 %v1525, 1e-05
        %v1527 = vrsqrt.pop %v1526
        %v1528 = vmul.f32 %v1520, %v1527
        %v1529 = vlaneseq
        %v1530 = vshrl.u32 %v1529, 7
        %v1531 = vsub.s32 3, %v1530
        %v1532 = vrot.slane %v405, %v1531
        %v1533 = vmul.f32 %v1528, %v1532
        %v1534 = vlaneseq
        %v1535 = vshrl.u32 %v1534, 7
        %v1536 = vsub.s32 4, %v1535
        %v1537 = vrot.slane %v405, %v1536
        %v1538 = vadd.f32 %v1533, %v1537
        %v1539 = vld [vmem:[%s391] sm:$0xff]
        %v1540 = vld [vmem:[%s391 + $0x8] sm:$0xff]
        %v1541 = vld [vmem:[%s391 + $0x10] sm:$0xff]
        %v1542 = vld [vmem:[%s391 + $0x18] sm:$0xff]
        %v1544 = vlaneseq
        %v1545 = vshrl.u32 %v1544, 7
        %v1546 = vsub.s32 0, %v1545
        %v1547 = vrot.slane %v406, %v1546
        %v1550 = vsel %vm407, %v1538, 0
        %1552 = vmatprep.subr.mxu0 0.0
        %1553 = vmatpush1.msra.mxu0 %v1539
        %1554 = vmatprep.subr.mxu0 0.0
        %1555 = vmatpush1.msra.mxu0 %v1540
        %1556 = vmatprep.subr.mxu0 0.0
        %1557 = vmatpush1.msra.mxu0 %v1541
        %1558 = vmatprep.subr.mxu0 0.0
        %1559 = vmatpush1.msra.mxu0 %v1542
        %1560 = vmatprep.subr.mxu0 0.0
        %1561 = vmatpush1.msra.mxu0 0.0
        %1562 = vmatprep.subr.mxu0 0.0
        %1563 = vmatpush1.msra.mxu0 0.0
        %1564 = vmatprep.subr.mxu0 0.0
        %1565 = vmatpush1.msra.mxu0 0.0
        %1566 = vmatprep.subr.mxu0 0.0
        %1567 = vmatpush1.msra.mxu0 0.0
        %1568 = vmatprep.subr.mxu0 0.0
        %1569 = vmatpush1.msra.mxu0 0.0
        %1570 = vmatprep.subr.mxu0 0.0
        %1571 = vmatpush1.msra.mxu0 0.0
        %1572 = vmatprep.subr.mxu0 0.0
        %1573 = vmatpush1.msra.mxu0 0.0
        %1574 = vmatprep.subr.mxu0 0.0
        %1575 = vmatpush1.msra.mxu0 0.0
        %1576 = vmatprep.subr.mxu0 0.0
        %1577 = vmatpush1.msra.mxu0 0.0
        %1578 = vmatprep.subr.mxu0 0.0
        %1579 = vmatpush1.msra.mxu0 0.0
        %1580 = vmatprep.subr.mxu0 0.0
        %1581 = vmatpush1.msra.mxu0 0.0
        %1582 = vmatprep.subr.mxu0 0.0
        %1583 = vmatpush1.msra.mxu0 0.0
        %1584 = vmatprep.subr.mxu0 0.0
        %1585 = vmatpush1.msra.mxu0 0.0
        %1586 = vmatprep.subr.mxu0 0.0
        %1587 = vmatpush1.msra.mxu0 0.0
        %1588 = vmatprep.subr.mxu0 0.0
        %1589 = vmatpush1.msra.mxu0 0.0
        %1590 = vmatprep.subr.mxu0 0.0
        %1591 = vmatpush1.msra.mxu0 0.0
        %1592 = vmatprep.subr.mxu0 0.0
        %1593 = vmatpush1.msra.mxu0 0.0
        %1594 = vmatprep.subr.mxu0 0.0
        %1595 = vmatpush1.msra.mxu0 0.0
        %1596 = vmatprep.subr.mxu0 0.0
        %1597 = vmatpush1.msra.mxu0 0.0
        %1598 = vmatprep.subr.mxu0 0.0
        %1599 = vmatpush1.msra.mxu0 0.0
        %1600 = vmatprep.subr.mxu0 0.0
        %1601 = vmatpush1.msra.mxu0 0.0
        %1602 = vmatprep.subr.mxu0 0.0
        %1603 = vmatpush1.msra.mxu0 0.0
        %1604 = vmatprep.subr.mxu0 0.0
        %1605 = vmatpush1.msra.mxu0 0.0
        %1606 = vmatprep.subr.mxu0 0.0
        %1607 = vmatpush1.msra.mxu0 0.0
        %1608 = vmatprep.subr.mxu0 0.0
        %1609 = vmatpush1.msra.mxu0 0.0
        %1610 = vmatprep.subr.mxu0 0.0
        %1611 = vmatpush1.msra.mxu0 0.0
        %1612 = vmatprep.subr.mxu0 0.0
        %1613 = vmatpush1.msra.mxu0 0.0
        %1614 = vmatprep.subr.mxu0 0.0
        %1615 = vmatpush1.msra.mxu0 0.0
        %1616 = vmatprep.mubr.f32.mxu0 0.0
        %1617 = vmatmul.mubr.f32.gmra.mrb[0].mxu0 %v1550
        %v1618 = vpop.f32.mrb[0].mxu0
        %v1619 = vadd.f32 %v1547, %v1618
        %v1620 = vpop.f32.mrb[0].mxu0
        %1621 = vdwg.mxu0
        %v1622 = vmul.f32 %v1619, 0.5
        %v1623 = vmul.f32 %v1619, 0.70710677
        %v1624 = verf.f32.pop %v1623
        %v1625 = vadd.f32 %v1624, 1.0
        %v1626 = vmul.f32 %v1622, %v1625
        %v1627 = vld [vmem:[%s396] sm:$0xff]
        %v1628 = vld [vmem:[%s396 + $0x8] sm:$0xff]
        %v1629 = vld [vmem:[%s396 + $0x10] sm:$0xff]
        %v1630 = vld [vmem:[%s396 + $0x18] sm:$0xff]
        %v1631 = vld [vmem:[%s396 + $0x20] sm:$0xff]
        %v1632 = vld [vmem:[%s396 + $0x28] sm:$0xff]
        %v1633 = vld [vmem:[%s396 + $0x30] sm:$0xff]
        %v1634 = vld [vmem:[%s396 + $0x38] sm:$0xff]
        %v1635 = vlaneseq
        %v1636 = vshrl.u32 %v1635, 7
        %v1637 = vsub.s32 5, %v1636
        %v1638 = vrot.slane %v405, %v1637
        %vm1639 = vcmask 523264
        %v1641 = vsel %vm1639, %v1626, 0
        %1643 = vmatprep.subr.mxu0 0.0
        %1644 = vmatpush1.msra.mxu0 %v1627
        %1645 = vmatprep.subr.mxu0 0.0
        %1646 = vmatpush1.msra.mxu0 %v1628
        %1647 = vmatprep.subr.mxu0 0.0
        %1648 = vmatpush1.msra.mxu0 %v1629
        %1649 = vmatprep.subr.mxu0 0.0
        %1650 = vmatpush1.msra.mxu0 %v1630
        %1651 = vmatprep.subr.mxu0 0.0
        %1652 = vmatpush1.msra.mxu0 %v1631
        %1653 = vmatprep.subr.mxu0 0.0
        %1654 = vmatpush1.msra.mxu0 %v1632
        %1655 = vmatprep.subr.mxu0 0.0
        %1656 = vmatpush1.msra.mxu0 %v1633
        %1657 = vmatprep.subr.mxu0 0.0
        %1658 = vmatpush1.msra.mxu0 %v1634
        %1659 = vmatprep.subr.mxu0 0.0
        %1660 = vmatpush1.msra.mxu0 0.0
        %1661 = vmatprep.subr.mxu0 0.0
        %1662 = vmatpush1.msra.mxu0 0.0
        %1663 = vmatprep.subr.mxu0 0.0
        %1664 = vmatpush1.msra.mxu0 0.0
        %1665 = vmatprep.subr.mxu0 0.0
        %1666 = vmatpush1.msra.mxu0 0.0
        %1667 = vmatprep.subr.mxu0 0.0
        %1668 = vmatpush1.msra.mxu0 0.0
        %1669 = vmatprep.subr.mxu0 0.0
        %1670 = vmatpush1.msra.mxu0 0.0
        %1671 = vmatprep.subr.mxu0 0.0
        %1672 = vmatpush1.msra.mxu0 0.0
        %1673 = vmatprep.subr.mxu0 0.0
        %1674 = vmatpush1.msra.mxu0 0.0
        %1675 = vmatprep.subr.mxu0 0.0
        %1676 = vmatpush1.msra.mxu0 0.0
        %1677 = vmatprep.subr.mxu0 0.0
        %1678 = vmatpush1.msra.mxu0 0.0
        %1679 = vmatprep.subr.mxu0 0.0
        %1680 = vmatpush1.msra.mxu0 0.0
        %1681 = vmatprep.subr.mxu0 0.0
        %1682 = vmatpush1.msra.mxu0 0.0
        %1683 = vmatprep.subr.mxu0 0.0
        %1684 = vmatpush1.msra.mxu0 0.0
        %1685 = vmatprep.subr.mxu0 0.0
        %1686 = vmatpush1.msra.mxu0 0.0
        %1687 = vmatprep.subr.mxu0 0.0
        %1688 = vmatpush1.msra.mxu0 0.0
        %1689 = vmatprep.subr.mxu0 0.0
        %1690 = vmatpush1.msra.mxu0 0.0
        %1691 = vmatprep.subr.mxu0 0.0
        %1692 = vmatpush1.msra.mxu0 0.0
        %1693 = vmatprep.subr.mxu0 0.0
        %1694 = vmatpush1.msra.mxu0 0.0
        %1695 = vmatprep.subr.mxu0 0.0
        %1696 = vmatpush1.msra.mxu0 0.0
        %1697 = vmatprep.subr.mxu0 0.0
        %1698 = vmatpush1.msra.mxu0 0.0
        %1699 = vmatprep.subr.mxu0 0.0
        %1700 = vmatpush1.msra.mxu0 0.0
        %1701 = vmatprep.subr.mxu0 0.0
        %1702 = vmatpush1.msra.mxu0 0.0
        %1703 = vmatprep.subr.mxu0 0.0
        %1704 = vmatpush1.msra.mxu0 0.0
        %1705 = vmatprep.subr.mxu0 0.0
        %1706 = vmatpush1.msra.mxu0 0.0
        %1707 = vmatprep.mubr.f32.mxu0 0.0
        %1708 = vmatmul.mubr.f32.gmra.mrb[0].mxu0 %v1641
        %v1709 = vpop.f32.mrb[0].mxu0
        %v1710 = vadd.f32 %v1638, %v1709
        %v1711 = vpop.f32.mrb[0].mxu0
        %1712 = vdwg.mxu0
        %v1713 = vadd.f32 %v1515, %v1710
        %1714 = vst.msk [vmem:[%s365] sm:$0xff] %vm407, %v1713
        %s1715 = sand.u32 %s223, 1
        %s1716 = scalar_lea.sflag [#allocation3], %s1715
        %s1717 = sand.u32 %s223, 1
        %s1718 = smul.addr %s1717, 8
        %s1719 = scalar_lea.vmem [#allocation2], %s1718
        // Predicated region
        $region53: #{tpu_custom_call.1} parent=47 // pred_check
          %p1720 = pneg %p233
        $region54: #{tpu_custom_call.1} parent=47 // pred_check_branch
          %1722 = sbr.rel (%p1720) target = $region56
        $region55: #{tpu_custom_call.1} parent=47 // pred_region
          %s1724 = ssub.s32 128, 128
          %1725 = vsyncadd %s1716, %s1724
          %s1726 = smul.addr %s25, 128
          %s1727 = scalar_lea.hbm %s7, %s1726
          %s1729 = sshll.u32 %s1719, 4
          %s1730 = int_to_ptr.vmem [resolvable:$true] %s1729
          %1732 = dma.vmem_to_hbm [thread:$0]  %s1730, 128, %s1727, %s1716
        $region56: #{tpu_custom_call.1} parent=47 // pred_fallthru
          _
      $region48: #{tpu_custom_call.1} parent=5 // pred_fallthru
        _
      %p1733 = scmp.le.s32.totalorder 2, %s16
      // Predicated region
      $region57: #{tpu_custom_call.1} parent=5 // pred_check
        %p1734 = pneg %p1733
      $region58: #{tpu_custom_call.1} parent=5 // pred_check_branch
        %1736 = sbr.rel (%p1734) target = $region60
      $region59: #{tpu_custom_call.1} parent=5 // pred_region
        %s1737 = ssub.s32 %s16, 2
        // Predicated region
        $region61: #{tpu_custom_call.1} parent=59 // pred_check
          %p1738 = pneg %p239
        $region62: #{tpu_custom_call.1} parent=59 // pred_check_branch
          %1740 = sbr.rel (%p1738) target = $region64
        $region63: #{tpu_custom_call.1} parent=59 // pred_region
          %s1741 = sand.u32 %s224, 1
          %s1742 = scalar_lea.sflag [#allocation3], %s1741
          %s1743 = sand.u32 %s224, 1
          %s1744 = smul.addr %s1743, 8
          %s1745 = scalar_lea.vmem [#allocation2], %s1744
          %1746 = dma.done %s1742, 128
        $region64: #{tpu_custom_call.1} parent=59 // pred_fallthru
          _
      $region60: #{tpu_custom_call.1} parent=5 // pred_fallthru
        _
    $region6: #{tpu_custom_call.1} parent=1 // loop_footer
      %s20 = sadd.s32 1, %s16
    $region7: #{tpu_custom_call.1} parent=1 // loop_footer_branch
      %15 = sbr.rel target = $region3
    $region8: #{tpu_custom_call.1} parent=1 // loop_exit
      _
    %1747 = vsyncpa [#allocation3], 1
    %s1748 = scalar_lea.sflag [#allocation3], 1
    %1749 = vsyncpa %s1748, 1

</llo_original>
